<compile_context>
chip_gen: v7x
topology: tpu7x:2x2x1
jax: 0.10.0
libtpu: 0.0.40
codegen_flags: <defaults>
</compile_context>

<pallas_src>
import functools

import jax
import jax.numpy as jnp
from jax.experimental import pallas as pl
from jax.experimental.pallas import tpu as pltpu

# ----------------------------- small-scale config -----------------------------
N = 16           # batch (multiple of the 8-row batch tile -> full-sublane output stores)
C = 128          # backbone feature channels (swin_v2_b would be 1024; small stand-in)
H = W = 8        # spatial size of the final feature map
HW = H * W
NUM_CLASSES = 8  # multi-label classes
LANES = 128      # lane width; class dim is padded to exactly 128 (matmul is not the bottleneck)
LN_EPS = 1e-5    # nn.LayerNorm default
NB_TILE = 8      # batch rows per grid step; at real swin scale pick the largest tile that
                 # fits the per-generation VMEM budget (v7x: 64 MiB; v5e/v6e: 128 MiB)


def _head_kernel(x_ref, w_ref, b_ref, out_ref):
    """Per-batch-tile head: LayerNorm(C) (affine folded into W/b) -> mean over HW
    -> Linear -> sigmoid.

    x_ref:   (NB, HW, C)  bf16 pre-norm feature map, channels last
    w_ref:   (C, C_PAD)   f32 folded classifier weight  gamma[:,None] * W^T, zero-padded
    b_ref:   (1, C_PAD)   f32 folded classifier bias    beta @ W^T + b,       zero-padded
    out_ref: (NB, C_PAD)  f32 sigmoid probabilities (padded lanes hold sigmoid(0)=0.5,
                          sliced off by the wrapper)
    """
    x = x_ref[...].astype(jnp.float32)                       # upcast once; stats in f32

    # Single-pass LayerNorm statistics over channels: two independent XLU reductions.
    inv_c = 1.0 / x.shape[-1]
    s1 = jnp.sum(x, axis=-1, keepdims=True)                  # (NB, HW, 1)
    s2 = jnp.sum(x * x, axis=-1, keepdims=True)              # (NB, HW, 1)
    mu = s1 * inv_c
    var = jnp.maximum(s2 * inv_c - mu * mu, 0.0)
    xn = (x - mu) * jax.lax.rsqrt(var + LN_EPS)               # normalized; NO affine here

    # permute + AdaptiveAvgPool2d(1) + Flatten(1): mean over all spatial positions.
    # gamma/beta commute with this mean, so they were folded into w_ref/b_ref on the host.
    pooled = jnp.mean(xn, axis=1)                             # (NB, C)

    # Dropout(p=classify_dropout) is identity in eval mode.
    # Linear for the whole tile in one MXU matmul, then sigmoid (EUP).
    logits = jnp.dot(pooled, w_ref[...],
                     preferred_element_type=jnp.float32) + b_ref[...]   # (NB, C_PAD)
    out_ref[...] = jax.nn.sigmoid(logits).astype(out_ref.dtype)


def prepare_head_params(gamma, beta, w_cls, b_cls):
    """One-time host-side parameter prep (NOT per forward call):
      * fold the LayerNorm affine into the classifier,
      * pre-transpose the weight to (C, C_PAD),
      * zero-pad the class dim to a lane-dense 128 (unmasked vst; padded lanes sliced off)."""
    c = gamma.shape[0]
    num_classes = w_cls.shape[0]
    c_pad = max(LANES, pl.cdiv(num_classes, LANES) * LANES)   # keep at 128 even on 256-wide MXUs
    g = gamma.astype(jnp.float32)
    bt = beta.astype(jnp.float32)
    wt = w_cls.T.astype(jnp.float32)                          # (C, num_classes)
    w_eff = jnp.zeros((c, c_pad), jnp.float32).at[:, :num_classes].set(g[:, None] * wt)
    b_eff = jnp.zeros((1, c_pad), jnp.float32).at[0, :num_classes].set(
        bt @ wt + b_cls.astype(jnp.float32))
    return w_eff, b_eff


@functools.partial(jax.jit, static_argnames=("num_classes", "nb_tile"))
def multilabel_head(feat_nhwc, w_eff, b_eff, *, num_classes, nb_tile=NB_TILE):
    """feat_nhwc: (N, H, W, C) bf16 pre-norm backbone feature map (channels last, as
    swin_v2_b's `features` stage emits it).  Returns sigmoid probs, shape (N, num_classes)."""
    n, h, w, c = feat_nhwc.shape
    hw = h * w
    c_pad = w_eff.shape[1]

    # Free reshape only (channels already on the lane axis); pad batch to a multiple of the
    # 8-row tile so the (NB, 128) output block uses full sublanes (padded rows sliced off).
    feat = feat_nhwc.reshape(n, hw, c)
    n_pad = pl.cdiv(n, nb_tile) * nb_tile
    if n_pad != n:
        feat = jnp.pad(feat, ((0, n_pad - n), (0, 0), (0, 0)))

    out = pl.pallas_call(
        _head_kernel,
        out_shape=jax.ShapeDtypeStruct((n_pad, c_pad), jnp.float32),
        grid_spec=pltpu.PrefetchScalarGridSpec(
            num_scalar_prefetch=0,
            grid=(n_pad // nb_tile,),   # pipelined batch grid: HBM->VMEM DMA overlaps compute
            in_specs=[
                pl.BlockSpec((nb_tile, hw, c), lambda i: (i, 0, 0)),    # feature tile (bf16)
                pl.BlockSpec((c, c_pad), lambda i: (0, 0)),             # folded W^T (resident)
                pl.BlockSpec((1, c_pad), lambda i: (0, 0)),             # folded bias (resident)
                # At real swin scale (C=1024) single-buffer the constant-index W/b operands
                # (pipeline_mode=pl.Buffered(1)) to reclaim ~0.5 MB VMEM on v7x.
            ],
            out_specs=pl.BlockSpec((nb_tile, c_pad), lambda i: (i, 0)), # lane-dense, full sublanes
        ),
        compiler_params=pltpu.CompilerParams(
            # Batch tiles are independent -> parallel (2-way TC sharding on v7x; harmless on
            # single-TC v5e/v6e).  Default scoped VMEM is ample at this size; at real scale
            # set vmem_limit_bytes and re-derive nb_tile per generation.
            dimension_semantics=("parallel",),
        ),
    )(feat, w_eff, b_eff)

    return out[:n, :num_classes]


def _reference(feat_nhwc_f32, gamma, beta, w_cls, b_cls):
    """Plain-JAX reference mirroring the PyTorch forward semantics (eval mode), un-folded."""
    x = feat_nhwc_f32                                              # NHWC, f32
    mu = jnp.mean(x, axis=-1, keepdims=True)
    var = jnp.mean((x - mu) ** 2, axis=-1, keepdims=True)          # biased, like nn.LayerNorm
    x = (x - mu) / jnp.sqrt(var + LN_EPS) * gamma + beta           # LayerNorm(C)
    pooled = jnp.mean(x, axis=(1, 2))                              # permute + avgpool + flatten
    logits = pooled @ w_cls.T + b_cls                              # dropout = identity (eval)
    return jax.nn.sigmoid(logits)


if __name__ == "__main__":
    key = jax.random.PRNGKey(0)
    k_feat, k_g, k_b, k_w, k_bias = jax.random.split(key, 5)

    # Synthetic pre-norm backbone feature map (stand-in for swin_v2_b truncated `features`),
    # channels last, fed to the kernel in bf16 to halve HBM traffic.
    feat_f32 = jax.random.normal(k_feat, (N, H, W, C), dtype=jnp.float32)
    feat_bf16 = feat_f32.astype(jnp.bfloat16)

    # deterministic parameters
    gamma = 1.0 + 0.1 * jax.random.normal(k_g, (C,), dtype=jnp.float32)   # LayerNorm weight
    beta = 0.1 * jax.random.normal(k_b, (C,), dtype=jnp.float32)          # LayerNorm bias
    w_cls = 0.05 * jax.random.normal(k_w, (NUM_CLASSES, C), dtype=jnp.float32)
    b_cls = 0.05 * jax.random.normal(k_bias, (NUM_CLASSES,), dtype=jnp.float32)

    # One-time parameter prep (fold + transpose + pad); never re-done per forward call.
    w_eff, b_eff = prepare_head_params(gamma, beta, w_cls, b_cls)

    out = multilabel_head(feat_bf16, w_eff, b_eff, num_classes=NUM_CLASSES)
    out = jax.block_until_ready(out)

    # Reference sees the same bf16-rounded features (upcast), but applies the un-folded
    # gamma/beta and two-pass variance, i.e. the literal PyTorch eval-mode math.
    ref = _reference(feat_bf16.astype(jnp.float32), gamma, beta, w_cls, b_cls)

    assert out.shape == (N, NUM_CLASSES)
    assert jnp.allclose(out, ref, atol=1e-5, rtol=1e-5), "Pallas kernel mismatch vs reference"

    print("KERNEL_OK")
</pallas_src>

<mosaic_0001>
module attributes {stable_mosaic.version = 11 : i64} {
  func.func @_head_kernel(%arg0: i32, %arg1: memref<8x64x128xbf16, #tpu.memory_space<vmem>>, %arg2: memref<128x128xf32, #tpu.memory_space<vmem>>, %arg3: memref<1x128xf32, #tpu.memory_space<vmem>>, %arg4: memref<8x128xf32, #tpu.memory_space<vmem>>) attributes {dimension_semantics = [#tpu.dimension_semantics<parallel>], iteration_bounds = array<i64: 2>, scalar_prefetch = 0 : i64, scratch_operands = 0 : i64, tpu.core_type = #tpu.core_type<tc>, window_params = [{transform_indices = @transform_0, window_bounds = array<i64: 8, 64, 128>}, {pipeline_mode = #tpu.pipeline_mode<synchronous>, transform_indices = @transform_1, window_bounds = array<i64: 128, 128>}, {pipeline_mode = #tpu.pipeline_mode<synchronous>, transform_indices = @transform_2, window_bounds = array<i64: 1, 128>}, {transform_indices = @transform_3, window_bounds = array<i64: 8, 128>}]} {
    %c0 = arith.constant 0 : index
    %c0_0 = arith.constant 0 : index
    %c0_1 = arith.constant 0 : index
    %0 = vector.load %arg1[%c0, %c0_0, %c0_1] : memref<8x64x128xbf16, #tpu.memory_space<vmem>>, vector<8x64x128xbf16>
    %1 = arith.extf %0 : vector<8x64x128xbf16> to vector<8x64x128xf32>
    %cst = arith.constant dense<0.000000e+00> : vector<8x64xf32>
    %2 = vector.multi_reduction <add>, %1, %cst [2] : vector<8x64x128xf32> to vector<8x64xf32>
    %3 = vector.shape_cast %2 : vector<8x64xf32> to vector<8x64x1xf32>
    %4 = arith.mulf %1, %1 : vector<8x64x128xf32>
    %cst_2 = arith.constant dense<0.000000e+00> : vector<8x64xf32>
    %5 = vector.multi_reduction <add>, %4, %cst_2 [2] : vector<8x64x128xf32> to vector<8x64xf32>
    %6 = vector.shape_cast %5 : vector<8x64xf32> to vector<8x64x1xf32>
    %cst_3 = arith.constant 7.812500e-03 : f32
    %7 = vector.broadcast %cst_3 : f32 to vector<8x64x1xf32>
    %8 = arith.mulf %3, %7 : vector<8x64x1xf32>
    %cst_4 = arith.constant 7.812500e-03 : f32
    %9 = vector.broadcast %cst_4 : f32 to vector<8x64x1xf32>
    %10 = arith.mulf %6, %9 : vector<8x64x1xf32>
    %11 = arith.mulf %8, %8 : vector<8x64x1xf32>
    %12 = arith.subf %10, %11 : vector<8x64x1xf32>
    %cst_5 = arith.constant 0.000000e+00 : f32
    %13 = vector.broadcast %cst_5 : f32 to vector<8x64x1xf32>
    %14 = arith.maximumf %12, %13 : vector<8x64x1xf32>
    %15 = vector.broadcast %8 : vector<8x64x1xf32> to vector<8x64x128xf32>
    %16 = arith.subf %1, %15 : vector<8x64x128xf32>
    %cst_6 = arith.constant 9.99999974E-6 : f32
    %17 = vector.broadcast %cst_6 : f32 to vector<8x64x1xf32>
    %18 = arith.addf %14, %17 : vector<8x64x1xf32>
    %19 = math.rsqrt %18 : vector<8x64x1xf32>
    %20 = vector.broadcast %19 : vector<8x64x1xf32> to vector<8x64x128xf32>
    %21 = arith.mulf %16, %20 : vector<8x64x128xf32>
    %cst_7 = arith.constant dense<0.000000e+00> : vector<8x128xf32>
    %22 = vector.multi_reduction <add>, %21, %cst_7 [1] : vector<8x64x128xf32> to vector<8x128xf32>
    %cst_8 = arith.constant 6.400000e+01 : f32
    %23 = vector.broadcast %cst_8 : f32 to vector<8x128xf32>
    %24 = arith.divf %22, %23 : vector<8x128xf32>
    %c0_9 = arith.constant 0 : index
    %c0_10 = arith.constant 0 : index
    %25 = vector.load %arg2[%c0_9, %c0_10] : memref<128x128xf32, #tpu.memory_space<vmem>>, vector<128x128xf32>
    %cst_11 = arith.constant dense<0.000000e+00> : vector<8x128xf32>
    %26 = tpu.matmul %24, %25, %cst_11 {dimension_numbers = #tpu.dot_dimension_numbers<[1], [0], [0], [1], [0, 0, 1, 1], [], []>} : vector<8x128xf32>, vector<128x128xf32>, vector<8x128xf32> -> vector<8x128xf32>
    %c0_12 = arith.constant 0 : index
    %c0_13 = arith.constant 0 : index
    %27 = vector.load %arg3[%c0_12, %c0_13] : memref<1x128xf32, #tpu.memory_space<vmem>>, vector<1x128xf32>
    %28 = vector.broadcast %27 : vector<1x128xf32> to vector<8x128xf32>
    %29 = arith.addf %26, %28 : vector<8x128xf32>
    %30 = arith.negf %29 : vector<8x128xf32>
    %31 = math.exp %30 : vector<8x128xf32>
    %cst_14 = arith.constant 1.000000e+00 : f32
    %32 = vector.broadcast %cst_14 : f32 to vector<8x128xf32>
    %33 = arith.addf %32, %31 : vector<8x128xf32>
    %34 = arith.divf %32, %33 : vector<8x128xf32>
    %c0_15 = arith.constant 0 : index
    %c0_16 = arith.constant 0 : index
    %35 = vector.load %arg4[%c0_15, %c0_16] : memref<8x128xf32, #tpu.memory_space<vmem>>, vector<8x128xf32>
    tpu.vector_store %arg4[%c0_15, %c0_16], %34 {strides = array<i32>} : memref<8x128xf32, #tpu.memory_space<vmem>>, vector<8x128xf32>,
    return
  }
  func.func @transform_0(%arg0: i32) -> (i32, i32, i32) {
    %c0_i32 = arith.constant 0 : i32
    %c0_i32_0 = arith.constant 0 : i32
    %c0_i32_1 = arith.constant 0 : i32
    return %arg0, %c0_i32, %c0_i32_0 : i32, i32, i32
  }
  func.func @transform_1(%arg0: i32) -> (i32, i32) {
    %c0_i32 = arith.constant 0 : i32
    %c0_i32_0 = arith.constant 0 : i32
    %c0_i32_1 = arith.constant 0 : i32
    return %c0_i32, %c0_i32_0 : i32, i32
  }
  func.func @transform_2(%arg0: i32) -> (i32, i32) {
    %c0_i32 = arith.constant 0 : i32
    %c0_i32_0 = arith.constant 0 : i32
    %c0_i32_1 = arith.constant 0 : i32
    return %c0_i32, %c0_i32_0 : i32, i32
  }
  func.func @transform_3(%arg0: i32) -> (i32, i32) {
    %c0_i32 = arith.constant 0 : i32
    %c0_i32_0 = arith.constant 0 : i32
    return %arg0, %c0_i32 : i32, i32
  }
}

</mosaic_0001>

<llo_original>
// kernel: multilabel_head.1
$region0: #{multilabel_head.1}
  #allocation0 [shape = 'u32[]', space=smem, size = 0x4, offset = 0x4, fixed_abs, tag = 'smem constant byte address 0x4 - core index']
  #allocation1 [shape = 'u32[144,128]{1,0:T(1,128)}', space=vmem, size = 0x12000, scoped, tag = 'internal scratch']
  %s0 = inlined_call_operand.hbm [shape: bf16[16,64,128], index: 0, kind: input, shape index: {}]
  %s1 = inlined_call_operand.hbm [shape: f32[128,128], index: 1, kind: input, shape index: {}]
  %s2 = inlined_call_operand.vmem [shape: f32[1,128], index: 2, kind: input, shape index: {}]
  %s3 = inlined_call_operand.vmem [shape: f32[16,128], index: 3, kind: output, shape index: {}]
  %s4 = sld [smem:[#allocation0]]
  $region53: #{multilabel_head.1} parent=0
    _
  %s6 = ssub.s32 1, %s4
  %s7 = scalar_select 0, %s6, %s4
  $region1: #{multilabel_head.1} parent=0
    #allocation2 [shape = 'u8[262144]{0}', space=vmem, size = 0x40000, scoped, tag = 'input window, operand 0']
    #allocation3 [shape = 's32[2]{0}', space=sflag, size = 0x8, scoped, tag = 'scoped memory for multilabel_head.1']
    #allocation4 [shape = 'u8[65536]{0}', space=vmem, size = 0x10000, scoped, tag = 'input window, operand 1, single buffered']
    #allocation5 [shape = 's32[1]{0}', space=sflag, size = 0x4, scoped, tag = 'scoped memory for multilabel_head.1']
    %8 = vsyncpa [#allocation3], 0
    %s9 = scalar_lea.sflag [#allocation3], 1
    %10 = vsyncpa %s9, 0
    %11 = vsyncpa [#allocation5], 0
    loop: start=0, step=1, limit=4
    $region2: #{multilabel_head.1} parent=1 // loop_pre_header
      _
    $region3: #{multilabel_head.1} parent=1 // loop_header
      %s13 = sphi 0, %s17
      %p14 = scmp.ge.s32.totalorder %s13, 4
      %s23 = sphi 0, %s25
      %s26 = sphi 0, %s23
      %s27 = sphi 0, %s26
      %s43 = sphi 0, %s27
      %s47 = sphi 0, %s47
      %s49 = sphi 0, %s47
      %s50 = sphi 0, %s49
      %s64 = sphi 0, %s50
      %s68 = sphi 0, %s68
      %s70 = sphi 0, %s68
      %s71 = sphi 0, %s70
      %s85 = sphi 0, %s71
      %s91 = sphi 0, %s93
      %s94 = sphi 0, %s91
      %s95 = sphi 0, %s94
      %s111 = sphi 0, %s95
    $region4: #{multilabel_head.1} parent=1 // loop_header_branch
      %16 = sbr.rel (%p14) target = $region8
    $region5: #{multilabel_head.1} parent=1 // loop_body
      %s18 = ssub.s32 %s13, 1
      %s19 = ssub.s32 %s13, 2
      %s20 = sadd.s32 %s13, 1
      %s21 = ssub.s32 %s13, %s20
      %p22 = scmp.eq.s32.totalorder %s21, 0
      %s24 = sadd.s32 %s23, 1
      %s25 = scalar_select %p22, %s23, %s24
      %p28 = pneg %p22
      %p29 = scmp.eq.s32.totalorder %s13, 1
      %p30 = por %p28, %p29
      %p31 = scmp.ne.s32.totalorder %s23, %s26
      %p32 = scmp.eq.s32.totalorder %s13, 0
      %p33 = por %p31, %p32
      %p34 = scmp.ne.s32.totalorder %s23, %s26
      %p35 = scmp.eq.s32.totalorder %s18, 1
      %p36 = por %p34, %p35
      %p37 = scmp.ne.s32.totalorder %s26, %s27
      %p38 = scmp.eq.s32.totalorder %s18, 0
      %p39 = por %p37, %p38
      %p40 = scmp.ne.s32.totalorder %s26, %s27
      %p41 = scmp.eq.s32.totalorder %s19, 1
      %p42 = por %p40, %p41
      %p44 = scmp.ne.s32.totalorder %s27, %s43
      %p45 = scmp.eq.s32.totalorder %s19, 0
      %p46 = por %p44, %p45
      %s48 = sadd.s32 %s47, 1
      %p51 = scmp.eq.s32.totalorder %s13, 1
      %p52 = scmp.ne.s32.totalorder %s47, %s49
      %p53 = scmp.eq.s32.totalorder %s13, 0
      %p54 = por %p52, %p53
      %p55 = scmp.ne.s32.totalorder %s47, %s49
      %p56 = scmp.eq.s32.totalorder %s18, 1
      %p57 = por %p55, %p56
      %p58 = scmp.ne.s32.totalorder %s49, %s50
      %p59 = scmp.eq.s32.totalorder %s18, 0
      %p60 = por %p58, %p59
      %p61 = scmp.ne.s32.totalorder %s49, %s50
      %p62 = scmp.eq.s32.totalorder %s19, 1
      %p63 = por %p61, %p62
      %p65 = scmp.ne.s32.totalorder %s50, %s64
      %p66 = scmp.eq.s32.totalorder %s19, 0
      %p67 = por %p65, %p66
      %s69 = sadd.s32 %s68, 1
      %p72 = scmp.eq.s32.totalorder %s13, 1
      %p73 = scmp.ne.s32.totalorder %s68, %s70
      %p74 = scmp.eq.s32.totalorder %s13, 0
      %p75 = por %p73, %p74
      %p76 = scmp.ne.s32.totalorder %s68, %s70
      %p77 = scmp.eq.s32.totalorder %s18, 1
      %p78 = por %p76, %p77
      %p79 = scmp.ne.s32.totalorder %s70, %s71
      %p80 = scmp.eq.s32.totalorder %s18, 0
      %p81 = por %p79, %p80
      %p82 = scmp.ne.s32.totalorder %s70, %s71
      %p83 = scmp.eq.s32.totalorder %s19, 1
      %p84 = por %p82, %p83
      %p86 = scmp.ne.s32.totalorder %s71, %s85
      %p87 = scmp.eq.s32.totalorder %s19, 0
      %p88 = por %p86, %p87
      %s89 = ssub.s32 %s13, %s20
      %p90 = scmp.eq.s32.totalorder %s89, 0
      %s92 = sadd.s32 %s91, 1
      %s93 = scalar_select %p90, %s91, %s92
      %p96 = pneg %p90
      %p97 = scmp.eq.s32.totalorder %s13, 1
      %p98 = por %p96, %p97
      %p99 = scmp.ne.s32.totalorder %s91, %s94
      %p100 = scmp.eq.s32.totalorder %s13, 0
      %p101 = por %p99, %p100
      %p102 = scmp.ne.s32.totalorder %s91, %s94
      %p103 = scmp.eq.s32.totalorder %s18, 1
      %p104 = por %p102, %p103
      %p105 = scmp.ne.s32.totalorder %s94, %s95
      %p106 = scmp.eq.s32.totalorder %s18, 0
      %p107 = por %p105, %p106
      %p108 = scmp.ne.s32.totalorder %s94, %s95
      %p109 = scmp.eq.s32.totalorder %s19, 1
      %p110 = por %p108, %p109
      %p112 = scmp.ne.s32.totalorder %s95, %s111
      %p113 = scmp.eq.s32.totalorder %s19, 0
      %p114 = por %p112, %p113
      %p115 = scmp.le.s32.totalorder 1, %s13
      %p116 = scmp.lt.s32.totalorder %s13, 3
      %p117 = pnand %p115, %p116
      %p118 = pneg %p117
      // Predicated region
      $region9: #{multilabel_head.1} parent=5 // pred_check
        _
      $region10: #{multilabel_head.1} parent=5 // pred_check_branch
        %120 = sbr.rel (%p117) target = $region12
      $region11: #{multilabel_head.1} parent=5 // pred_region
        %s121 = ssub.s32 %s13, 1
        // Predicated region
        $region13: #{multilabel_head.1} parent=11 // pred_check
          %p122 = pneg %p60
        $region14: #{multilabel_head.1} parent=11 // pred_check_branch
          %124 = sbr.rel (%p122) target = $region16
        $region15: #{multilabel_head.1} parent=11 // pred_region
          %s126 = ssub.s32 2048, 2048
          %127 = vsyncadd [#allocation5], %s126
          %s128 = sshll.u32 [#allocation4], 4
          %s129 = int_to_ptr.vmem [resolvable:$true] %s128
          %134 = dma.hbm_to_vmem [thread:$0]  %s1, 2048, %s129, [#allocation5], 128, 128, 8
        $region16: #{multilabel_head.1} parent=11 // pred_fallthru
          _
        // Predicated region
        $region17: #{multilabel_head.1} parent=11 // pred_check
          %p135 = pneg %p81
        $region18: #{multilabel_head.1} parent=11 // pred_check_branch
          %137 = sbr.rel (%p135) target = $region20
        $region19: #{multilabel_head.1} parent=11 // pred_region
          _
        $region20: #{multilabel_head.1} parent=11 // pred_fallthru
          _
      $region12: #{multilabel_head.1} parent=5 // pred_fallthru
        _
      %p138 = scmp.lt.s32.totalorder %s13, 2
      // Predicated region
      $region21: #{multilabel_head.1} parent=5 // pred_check
        %p139 = pneg %p138
      $region22: #{multilabel_head.1} parent=5 // pred_check_branch
        %141 = sbr.rel (%p139) target = $region24
      $region23: #{multilabel_head.1} parent=5 // pred_region
        // Predicated region
        $region25: #{multilabel_head.1} parent=23 // pred_check
          %p142 = pneg %p33
        $region26: #{multilabel_head.1} parent=23 // pred_check_branch
          %144 = sbr.rel (%p142) target = $region28
        $region27: #{multilabel_head.1} parent=23 // pred_region
          %s145 = sand.u32 %s23, 1
          %s146 = scalar_lea.sflag [#allocation3], %s145
          %s147 = sand.u32 %s23, 1
          %s148 = smul.addr %s147, 256
          %s149 = scalar_lea.vmem [#allocation2], %s148
          %s150 = smul.u32 8, %s13
          %s152 = ssub.s32 4096, 4096
          %153 = vsyncadd %s146, %s152
          %s154 = smul.addr %s150, 8
          %s155 = smul.addr %s154, 64
          %s156 = scalar_lea.hbm %s0, %s155
          %s157 = sshll.u32 %s149, 4
          %s158 = int_to_ptr.vmem [resolvable:$true] %s157
          %163 = dma.hbm_to_vmem [thread:$0]  %s156, 4096, %s158, %s146, 64, 64, 4
        $region28: #{multilabel_head.1} parent=23 // pred_fallthru
          _
      $region24: #{multilabel_head.1} parent=5 // pred_fallthru
        _
      %p164 = scmp.le.s32.totalorder 1, %s13
      %p165 = scmp.lt.s32.totalorder %s13, 3
      %p166 = pnand %p164, %p165
      %p167 = pneg %p166
      // Predicated region
      $region29: #{multilabel_head.1} parent=5 // pred_check
        _
      $region30: #{multilabel_head.1} parent=5 // pred_check_branch
        %169 = sbr.rel (%p166) target = $region32
      $region31: #{multilabel_head.1} parent=5 // pred_region
        %s170 = ssub.s32 %s13, 1
        %s171 = sand.u32 %s26, 1
        %s172 = scalar_lea.sflag [#allocation3], %s171
        %s173 = sand.u32 %s26, 1
        %s174 = smul.addr %s173, 256
        %s175 = scalar_lea.vmem [#allocation2], %s174
        // Predicated region
        $region33: #{multilabel_head.1} parent=31 // pred_check
          %p176 = pneg %p39
        $region34: #{multilabel_head.1} parent=31 // pred_check_branch
          %178 = sbr.rel (%p176) target = $region36
        $region35: #{multilabel_head.1} parent=31 // pred_region
          %179 = dma.done %s172, 4096
        $region36: #{multilabel_head.1} parent=31 // pred_fallthru
          _
        // Predicated region
        $region37: #{multilabel_head.1} parent=31 // pred_check
          %p180 = pneg %p60
        $region38: #{multilabel_head.1} parent=31 // pred_check_branch
          %182 = sbr.rel (%p180) target = $region40
        $region39: #{multilabel_head.1} parent=31 // pred_region
          %183 = dma.done [#allocation5], 2048
        $region40: #{multilabel_head.1} parent=31 // pred_fallthru
          _
        %s184 = sand.u32 %s26, 1
        %s185 = scalar_lea.sflag [#allocation3], %s184
        %s186 = sand.u32 %s26, 1
        %s187 = smul.addr %s186, 256
        %s188 = scalar_lea.vmem [#allocation2], %s187
        %p189 = pneg %p39
        %p190 = pneg %p36
        %p191 = pneg %p60
        %p192 = pneg %p57
        %p193 = pneg %p81
        %p194 = pneg %p78
        %p195 = pneg %p107
        %p196 = pneg %p104
        %p197 = scmp.lt.s32.totalorder %s18, 1
        %s198 = scalar_select %p197, %s18, 1
        %s199 = smul.addr %s198, 8
        %s200 = scalar_lea.vmem %s3, %s199
        %s201 = smul.u32 8, %s18
        %p202 = scmp.lt.s32.totalorder %s18, 1
        %s203 = scalar_select %p202, %s18, 1
        %s204 = smul.addr %s203, 8
        %s205 = scalar_lea.vmem %s3, %s204
        %v206 = vld [vmem:[%s175] sm:$0xf]
        %v207 = vld [vmem:[%s175 + $0x4] sm:$0xf]
        %v208 = vld [vmem:[%s175 + $0x8] sm:$0xf]
        %v209 = vld [vmem:[%s175 + $0xc] sm:$0xf]
        %v210 = vld [vmem:[%s175 + $0x10] sm:$0xf]
        %v211 = vld [vmem:[%s175 + $0x14] sm:$0xf]
        %v212 = vld [vmem:[%s175 + $0x18] sm:$0xf]
        %v213 = vld [vmem:[%s175 + $0x1c] sm:$0xf]
        %v214 = vld [vmem:[%s175 + $0x20] sm:$0xf]
        %v215 = vld [vmem:[%s175 + $0x24] sm:$0xf]
        %v216 = vld [vmem:[%s175 + $0x28] sm:$0xf]
        %v217 = vld [vmem:[%s175 + $0x2c] sm:$0xf]
        %v218 = vld [vmem:[%s175 + $0x30] sm:$0xf]
        %v219 = vld [vmem:[%s175 + $0x34] sm:$0xf]
        %v220 = vld [vmem:[%s175 + $0x38] sm:$0xf]
        %v221 = vld [vmem:[%s175 + $0x3c] sm:$0xf]
        %v222 = vld [vmem:[%s175 + $0x40] sm:$0xf]
        %v223 = vld [vmem:[%s175 + $0x44] sm:$0xf]
        %v224 = vld [vmem:[%s175 + $0x48] sm:$0xf]
        %v225 = vld [vmem:[%s175 + $0x4c] sm:$0xf]
        %v226 = vld [vmem:[%s175 + $0x50] sm:$0xf]
        %v227 = vld [vmem:[%s175 + $0x54] sm:$0xf]
        %v228 = vld [vmem:[%s175 + $0x58] sm:$0xf]
        %v229 = vld [vmem:[%s175 + $0x5c] sm:$0xf]
        %v230 = vld [vmem:[%s175 + $0x60] sm:$0xf]
        %v231 = vld [vmem:[%s175 + $0x64] sm:$0xf]
        %v232 = vld [vmem:[%s175 + $0x68] sm:$0xf]
        %v233 = vld [vmem:[%s175 + $0x6c] sm:$0xf]
        %v234 = vld [vmem:[%s175 + $0x70] sm:$0xf]
        %v235 = vld [vmem:[%s175 + $0x74] sm:$0xf]
        %v236 = vld [vmem:[%s175 + $0x78] sm:$0xf]
        %v237 = vld [vmem:[%s175 + $0x7c] sm:$0xf]
        %v238 = vld [vmem:[%s175 + $0x80] sm:$0xf]
        %v239 = vld [vmem:[%s175 + $0x84] sm:$0xf]
        %v240 = vld [vmem:[%s175 + $0x88] sm:$0xf]
        %v241 = vld [vmem:[%s175 + $0x8c] sm:$0xf]
        %v242 = vld [vmem:[%s175 + $0x90] sm:$0xf]
        %v243 = vld [vmem:[%s175 + $0x94] sm:$0xf]
        %v244 = vld [vmem:[%s175 + $0x98] sm:$0xf]
        %v245 = vld [vmem:[%s175 + $0x9c] sm:$0xf]
        %v246 = vld [vmem:[%s175 + $0xa0] sm:$0xf]
        %v247 = vld [vmem:[%s175 + $0xa4] sm:$0xf]
        %v248 = vld [vmem:[%s175 + $0xa8] sm:$0xf]
        %v249 = vld [vmem:[%s175 + $0xac] sm:$0xf]
        %v250 = vld [vmem:[%s175 + $0xb0] sm:$0xf]
        %v251 = vld [vmem:[%s175 + $0xb4] sm:$0xf]
        %v252 = vld [vmem:[%s175 + $0xb8] sm:$0xf]
        %v253 = vld [vmem:[%s175 + $0xbc] sm:$0xf]
        %v254 = vld [vmem:[%s175 + $0xc0] sm:$0xf]
        %v255 = vld [vmem:[%s175 + $0xc4] sm:$0xf]
        %v256 = vld [vmem:[%s175 + $0xc8] sm:$0xf]
        %v257 = vld [vmem:[%s175 + $0xcc] sm:$0xf]
        %v258 = vld [vmem:[%s175 + $0xd0] sm:$0xf]
        %v259 = vld [vmem:[%s175 + $0xd4] sm:$0xf]
        %v260 = vld [vmem:[%s175 + $0xd8] sm:$0xf]
        %v261 = vld [vmem:[%s175 + $0xdc] sm:$0xf]
        %v262 = vld [vmem:[%s175 + $0xe0] sm:$0xf]
        %v263 = vld [vmem:[%s175 + $0xe4] sm:$0xf]
        %v264 = vld [vmem:[%s175 + $0xe8] sm:$0xf]
        %v265 = vld [vmem:[%s175 + $0xec] sm:$0xf]
        %v266 = vld [vmem:[%s175 + $0xf0] sm:$0xf]
        %v267 = vld [vmem:[%s175 + $0xf4] sm:$0xf]
        %v268 = vld [vmem:[%s175 + $0xf8] sm:$0xf]
        %v269 = vld [vmem:[%s175 + $0xfc] sm:$0xf]
        %v270 = vunpack.c.l.bf16 %v206
        %v271 = vunpack.c.l.bf16 %v207
        %v272 = vunpack.c.l.bf16 %v208
        %v273 = vunpack.c.l.bf16 %v209
        %v274 = vunpack.c.l.bf16 %v210
        %v275 = vunpack.c.l.bf16 %v211
        %v276 = vunpack.c.l.bf16 %v212
        %v277 = vunpack.c.l.bf16 %v213
        %v278 = vunpack.c.l.bf16 %v214
        %v279 = vunpack.c.l.bf16 %v215
        %v280 = vunpack.c.l.bf16 %v216
        %v281 = vunpack.c.l.bf16 %v217
        %v282 = vunpack.c.l.bf16 %v218
        %v283 = vunpack.c.l.bf16 %v219
        %v284 = vunpack.c.l.bf16 %v220
        %v285 = vunpack.c.l.bf16 %v221
        %v286 = vunpack.c.l.bf16 %v222
        %v287 = vunpack.c.l.bf16 %v223
        %v288 = vunpack.c.l.bf16 %v224
        %v289 = vunpack.c.l.bf16 %v225
        %v290 = vunpack.c.l.bf16 %v226
        %v291 = vunpack.c.l.bf16 %v227
        %v292 = vunpack.c.l.bf16 %v228
        %v293 = vunpack.c.l.bf16 %v229
        %v294 = vunpack.c.l.bf16 %v230
        %v295 = vunpack.c.l.bf16 %v231
        %v296 = vunpack.c.l.bf16 %v232
        %v297 = vunpack.c.l.bf16 %v233
        %v298 = vunpack.c.l.bf16 %v234
        %v299 = vunpack.c.l.bf16 %v235
        %v300 = vunpack.c.l.bf16 %v236
        %v301 = vunpack.c.l.bf16 %v237
        %v302 = vunpack.c.l.bf16 %v238
        %v303 = vunpack.c.l.bf16 %v239
        %v304 = vunpack.c.l.bf16 %v240
        %v305 = vunpack.c.l.bf16 %v241
        %v306 = vunpack.c.l.bf16 %v242
        %v307 = vunpack.c.l.bf16 %v243
        %v308 = vunpack.c.l.bf16 %v244
        %v309 = vunpack.c.l.bf16 %v245
        %v310 = vunpack.c.l.bf16 %v246
        %v311 = vunpack.c.l.bf16 %v247
        %v312 = vunpack.c.l.bf16 %v248
        %v313 = vunpack.c.l.bf16 %v249
        %v314 = vunpack.c.l.bf16 %v250
        %v315 = vunpack.c.l.bf16 %v251
        %v316 = vunpack.c.l.bf16 %v252
        %v317 = vunpack.c.l.bf16 %v253
        %v318 = vunpack.c.l.bf16 %v254
        %v319 = vunpack.c.l.bf16 %v255
        %v320 = vunpack.c.l.bf16 %v256
        %v321 = vunpack.c.l.bf16 %v257
        %v322 = vunpack.c.l.bf16 %v258
        %v323 = vunpack.c.l.bf16 %v259
        %v324 = vunpack.c.l.bf16 %v260
        %v325 = vunpack.c.l.bf16 %v261
        %v326 = vunpack.c.l.bf16 %v262
        %v327 = vunpack.c.l.bf16 %v263
        %v328 = vunpack.c.l.bf16 %v264
        %v329 = vunpack.c.l.bf16 %v265
        %v330 = vunpack.c.l.bf16 %v266
        %v331 = vunpack.c.l.bf16 %v267
        %v332 = vunpack.c.l.bf16 %v268
        %v333 = vunpack.c.l.bf16 %v269
        %334 = vadd.xlane.f32.xlu0 %v270
        %v335 = vpop.xlane.xlu0 %334
        %336 = vadd.xlane.f32.xlu0 %v271
        %v337 = vpop.xlane.xlu0 %336
        %338 = vadd.xlane.f32.xlu0 %v272
        %v339 = vpop.xlane.xlu0 %338
        %340 = vadd.xlane.f32.xlu0 %v273
        %v341 = vpop.xlane.xlu0 %340
        %342 = vadd.xlane.f32.xlu0 %v274
        %v343 = vpop.xlane.xlu0 %342
        %344 = vadd.xlane.f32.xlu0 %v275
        %v345 = vpop.xlane.xlu0 %344
        %346 = vadd.xlane.f32.xlu0 %v276
        %v347 = vpop.xlane.xlu0 %346
        %348 = vadd.xlane.f32.xlu0 %v277
        %v349 = vpop.xlane.xlu0 %348
        %350 = vadd.xlane.f32.xlu0 %v278
        %v351 = vpop.xlane.xlu0 %350
        %352 = vadd.xlane.f32.xlu0 %v279
        %v353 = vpop.xlane.xlu0 %352
        %354 = vadd.xlane.f32.xlu0 %v280
        %v355 = vpop.xlane.xlu0 %354
        %356 = vadd.xlane.f32.xlu0 %v281
        %v357 = vpop.xlane.xlu0 %356
        %358 = vadd.xlane.f32.xlu0 %v282
        %v359 = vpop.xlane.xlu0 %358
        %360 = vadd.xlane.f32.xlu0 %v283
        %v361 = vpop.xlane.xlu0 %360
        %362 = vadd.xlane.f32.xlu0 %v284
        %v363 = vpop.xlane.xlu0 %362
        %364 = vadd.xlane.f32.xlu0 %v285
        %v365 = vpop.xlane.xlu0 %364
        %366 = vadd.xlane.f32.xlu0 %v286
        %v367 = vpop.xlane.xlu0 %366
        %368 = vadd.xlane.f32.xlu0 %v287
        %v369 = vpop.xlane.xlu0 %368
        %370 = vadd.xlane.f32.xlu0 %v288
        %v371 = vpop.xlane.xlu0 %370
        %372 = vadd.xlane.f32.xlu0 %v289
        %v373 = vpop.xlane.xlu0 %372
        %374 = vadd.xlane.f32.xlu0 %v290
        %v375 = vpop.xlane.xlu0 %374
        %376 = vadd.xlane.f32.xlu0 %v291
        %v377 = vpop.xlane.xlu0 %376
        %378 = vadd.xlane.f32.xlu0 %v292
        %v379 = vpop.xlane.xlu0 %378
        %380 = vadd.xlane.f32.xlu0 %v293
        %v381 = vpop.xlane.xlu0 %380
        %382 = vadd.xlane.f32.xlu0 %v294
        %v383 = vpop.xlane.xlu0 %382
        %384 = vadd.xlane.f32.xlu0 %v295
        %v385 = vpop.xlane.xlu0 %384
        %386 = vadd.xlane.f32.xlu0 %v296
        %v387 = vpop.xlane.xlu0 %386
        %388 = vadd.xlane.f32.xlu0 %v297
        %v389 = vpop.xlane.xlu0 %388
        %390 = vadd.xlane.f32.xlu0 %v298
        %v391 = vpop.xlane.xlu0 %390
        %392 = vadd.xlane.f32.xlu0 %v299
        %v393 = vpop.xlane.xlu0 %392
        %394 = vadd.xlane.f32.xlu0 %v300
        %v395 = vpop.xlane.xlu0 %394
        %396 = vadd.xlane.f32.xlu0 %v301
        %v397 = vpop.xlane.xlu0 %396
        %398 = vadd.xlane.f32.xlu0 %v302
        %v399 = vpop.xlane.xlu0 %398
        %400 = vadd.xlane.f32.xlu0 %v303
        %v401 = vpop.xlane.xlu0 %400
        %402 = vadd.xlane.f32.xlu0 %v304
        %v403 = vpop.xlane.xlu0 %402
        %404 = vadd.xlane.f32.xlu0 %v305
        %v405 = vpop.xlane.xlu0 %404
        %406 = vadd.xlane.f32.xlu0 %v306
        %v407 = vpop.xlane.xlu0 %406
        %408 = vadd.xlane.f32.xlu0 %v307
        %v409 = vpop.xlane.xlu0 %408
        %410 = vadd.xlane.f32.xlu0 %v308
        %v411 = vpop.xlane.xlu0 %410
        %412 = vadd.xlane.f32.xlu0 %v309
        %v413 = vpop.xlane.xlu0 %412
        %414 = vadd.xlane.f32.xlu0 %v310
        %v415 = vpop.xlane.xlu0 %414
        %416 = vadd.xlane.f32.xlu0 %v311
        %v417 = vpop.xlane.xlu0 %416
        %418 = vadd.xlane.f32.xlu0 %v312
        %v419 = vpop.xlane.xlu0 %418
        %420 = vadd.xlane.f32.xlu0 %v313
        %v421 = vpop.xlane.xlu0 %420
        %422 = vadd.xlane.f32.xlu0 %v314
        %v423 = vpop.xlane.xlu0 %422
        %424 = vadd.xlane.f32.xlu0 %v315
        %v425 = vpop.xlane.xlu0 %424
        %426 = vadd.xlane.f32.xlu0 %v316
        %v427 = vpop.xlane.xlu0 %426
        %428 = vadd.xlane.f32.xlu0 %v317
        %v429 = vpop.xlane.xlu0 %428
        %430 = vadd.xlane.f32.xlu0 %v318
        %v431 = vpop.xlane.xlu0 %430
        %432 = vadd.xlane.f32.xlu0 %v319
        %v433 = vpop.xlane.xlu0 %432
        %434 = vadd.xlane.f32.xlu0 %v320
        %v435 = vpop.xlane.xlu0 %434
        %436 = vadd.xlane.f32.xlu0 %v321
        %v437 = vpop.xlane.xlu0 %436
        %438 = vadd.xlane.f32.xlu0 %v322
        %v439 = vpop.xlane.xlu0 %438
        %440 = vadd.xlane.f32.xlu0 %v323
        %v441 = vpop.xlane.xlu0 %440
        %442 = vadd.xlane.f32.xlu0 %v324
        %v443 = vpop.xlane.xlu0 %442
        %444 = vadd.xlane.f32.xlu0 %v325
        %v445 = vpop.xlane.xlu0 %444
        %446 = vadd.xlane.f32.xlu0 %v326
        %v447 = vpop.xlane.xlu0 %446
        %448 = vadd.xlane.f32.xlu0 %v327
        %v449 = vpop.xlane.xlu0 %448
        %450 = vadd.xlane.f32.xlu0 %v328
        %v451 = vpop.xlane.xlu0 %450
        %452 = vadd.xlane.f32.xlu0 %v329
        %v453 = vpop.xlane.xlu0 %452
        %454 = vadd.xlane.f32.xlu0 %v330
        %v455 = vpop.xlane.xlu0 %454
        %456 = vadd.xlane.f32.xlu0 %v331
        %v457 = vpop.xlane.xlu0 %456
        %458 = vadd.xlane.f32.xlu0 %v332
        %v459 = vpop.xlane.xlu0 %458
        %460 = vadd.xlane.f32.xlu0 %v333
        %v461 = vpop.xlane.xlu0 %460
        %v462 = vmul.f32 %v270, %v270
        %v463 = vmul.f32 %v271, %v271
        %v464 = vmul.f32 %v272, %v272
        %v465 = vmul.f32 %v273, %v273
        %v466 = vmul.f32 %v274, %v274
        %v467 = vmul.f32 %v275, %v275
        %v468 = vmul.f32 %v276, %v276
        %v469 = vmul.f32 %v277, %v277
        %v470 = vmul.f32 %v278, %v278
        %v471 = vmul.f32 %v279, %v279
        %v472 = vmul.f32 %v280, %v280
        %v473 = vmul.f32 %v281, %v281
        %v474 = vmul.f32 %v282, %v282
        %v475 = vmul.f32 %v283, %v283
        %v476 = vmul.f32 %v284, %v284
        %v477 = vmul.f32 %v285, %v285
        %v478 = vmul.f32 %v286, %v286
        %v479 = vmul.f32 %v287, %v287
        %v480 = vmul.f32 %v288, %v288
        %v481 = vmul.f32 %v289, %v289
        %v482 = vmul.f32 %v290, %v290
        %v483 = vmul.f32 %v291, %v291
        %v484 = vmul.f32 %v292, %v292
        %v485 = vmul.f32 %v293, %v293
        %v486 = vmul.f32 %v294, %v294
        %v487 = vmul.f32 %v295, %v295
        %v488 = vmul.f32 %v296, %v296
        %v489 = vmul.f32 %v297, %v297
        %v490 = vmul.f32 %v298, %v298
        %v491 = vmul.f32 %v299, %v299
        %v492 = vmul.f32 %v300, %v300
        %v493 = vmul.f32 %v301, %v301
        %v494 = vmul.f32 %v302, %v302
        %v495 = vmul.f32 %v303, %v303
        %v496 = vmul.f32 %v304, %v304
        %v497 = vmul.f32 %v305, %v305
        %v498 = vmul.f32 %v306, %v306
        %v499 = vmul.f32 %v307, %v307
        %v500 = vmul.f32 %v308, %v308
        %v501 = vmul.f32 %v309, %v309
        %v502 = vmul.f32 %v310, %v310
        %v503 = vmul.f32 %v311, %v311
        %v504 = vmul.f32 %v312, %v312
        %v505 = vmul.f32 %v313, %v313
        %v506 = vmul.f32 %v314, %v314
        %v507 = vmul.f32 %v315, %v315
        %v508 = vmul.f32 %v316, %v316
        %v509 = vmul.f32 %v317, %v317
        %v510 = vmul.f32 %v318, %v318
        %v511 = vmul.f32 %v319, %v319
        %v512 = vmul.f32 %v320, %v320
        %v513 = vmul.f32 %v321, %v321
        %v514 = vmul.f32 %v322, %v322
        %v515 = vmul.f32 %v323, %v323
        %v516 = vmul.f32 %v324, %v324
        %v517 = vmul.f32 %v325, %v325
        %v518 = vmul.f32 %v326, %v326
        %v519 = vmul.f32 %v327, %v327
        %v520 = vmul.f32 %v328, %v328
        %v521 = vmul.f32 %v329, %v329
        %v522 = vmul.f32 %v330, %v330
        %v523 = vmul.f32 %v331, %v331
        %v524 = vmul.f32 %v332, %v332
        %v525 = vmul.f32 %v333, %v333
        %526 = vadd.xlane.f32.xlu0 %v462
        %v527 = vpop.xlane.xlu0 %526
        %528 = vadd.xlane.f32.xlu0 %v463
        %v529 = vpop.xlane.xlu0 %528
        %530 = vadd.xlane.f32.xlu0 %v464
        %v531 = vpop.xlane.xlu0 %530
        %532 = vadd.xlane.f32.xlu0 %v465
        %v533 = vpop.xlane.xlu0 %532
        %534 = vadd.xlane.f32.xlu0 %v466
        %v535 = vpop.xlane.xlu0 %534
        %536 = vadd.xlane.f32.xlu0 %v467
        %v537 = vpop.xlane.xlu0 %536
        %538 = vadd.xlane.f32.xlu0 %v468
        %v539 = vpop.xlane.xlu0 %538
        %540 = vadd.xlane.f32.xlu0 %v469
        %v541 = vpop.xlane.xlu0 %540
        %542 = vadd.xlane.f32.xlu0 %v470
        %v543 = vpop.xlane.xlu0 %542
        %544 = vadd.xlane.f32.xlu0 %v471
        %v545 = vpop.xlane.xlu0 %544
        %546 = vadd.xlane.f32.xlu0 %v472
        %v547 = vpop.xlane.xlu0 %546
        %548 = vadd.xlane.f32.xlu0 %v473
        %v549 = vpop.xlane.xlu0 %548
        %550 = vadd.xlane.f32.xlu0 %v474
        %v551 = vpop.xlane.xlu0 %550
        %552 = vadd.xlane.f32.xlu0 %v475
        %v553 = vpop.xlane.xlu0 %552
        %554 = vadd.xlane.f32.xlu0 %v476
        %v555 = vpop.xlane.xlu0 %554
        %556 = vadd.xlane.f32.xlu0 %v477
        %v557 = vpop.xlane.xlu0 %556
        %558 = vadd.xlane.f32.xlu0 %v478
        %v559 = vpop.xlane.xlu0 %558
        %560 = vadd.xlane.f32.xlu0 %v479
        %v561 = vpop.xlane.xlu0 %560
        %562 = vadd.xlane.f32.xlu0 %v480
        %v563 = vpop.xlane.xlu0 %562
        %564 = vadd.xlane.f32.xlu0 %v481
        %v565 = vpop.xlane.xlu0 %564
        %566 = vadd.xlane.f32.xlu0 %v482
        %v567 = vpop.xlane.xlu0 %566
        %568 = vadd.xlane.f32.xlu0 %v483
        %v569 = vpop.xlane.xlu0 %568
        %570 = vadd.xlane.f32.xlu0 %v484
        %v571 = vpop.xlane.xlu0 %570
        %572 = vadd.xlane.f32.xlu0 %v485
        %v573 = vpop.xlane.xlu0 %572
        %574 = vadd.xlane.f32.xlu0 %v486
        %v575 = vpop.xlane.xlu0 %574
        %576 = vadd.xlane.f32.xlu0 %v487
        %v577 = vpop.xlane.xlu0 %576
        %578 = vadd.xlane.f32.xlu0 %v488
        %v579 = vpop.xlane.xlu0 %578
        %580 = vadd.xlane.f32.xlu0 %v489
        %v581 = vpop.xlane.xlu0 %580
        %582 = vadd.xlane.f32.xlu0 %v490
        %v583 = vpop.xlane.xlu0 %582
        %584 = vadd.xlane.f32.xlu0 %v491
        %v585 = vpop.xlane.xlu0 %584
        %586 = vadd.xlane.f32.xlu0 %v492
        %v587 = vpop.xlane.xlu0 %586
        %588 = vadd.xlane.f32.xlu0 %v493
        %v589 = vpop.xlane.xlu0 %588
        %590 = vadd.xlane.f32.xlu0 %v494
        %v591 = vpop.xlane.xlu0 %590
        %592 = vadd.xlane.f32.xlu0 %v495
        %v593 = vpop.xlane.xlu0 %592
        %594 = vadd.xlane.f32.xlu0 %v496
        %v595 = vpop.xlane.xlu0 %594
        %596 = vadd.xlane.f32.xlu0 %v497
        %v597 = vpop.xlane.xlu0 %596
        %598 = vadd.xlane.f32.xlu0 %v498
        %v599 = vpop.xlane.xlu0 %598
        %600 = vadd.xlane.f32.xlu0 %v499
        %v601 = vpop.xlane.xlu0 %600
        %602 = vadd.xlane.f32.xlu0 %v500
        %v603 = vpop.xlane.xlu0 %602
        %604 = vadd.xlane.f32.xlu0 %v501
        %v605 = vpop.xlane.xlu0 %604
        %606 = vadd.xlane.f32.xlu0 %v502
        %v607 = vpop.xlane.xlu0 %606
        %608 = vadd.xlane.f32.xlu0 %v503
        %v609 = vpop.xlane.xlu0 %608
        %610 = vadd.xlane.f32.xlu0 %v504
        %v611 = vpop.xlane.xlu0 %610
        %612 = vadd.xlane.f32.xlu0 %v505
        %v613 = vpop.xlane.xlu0 %612
        %614 = vadd.xlane.f32.xlu0 %v506
        %v615 = vpop.xlane.xlu0 %614
        %616 = vadd.xlane.f32.xlu0 %v507
        %v617 = vpop.xlane.xlu0 %616
        %618 = vadd.xlane.f32.xlu0 %v508
        %v619 = vpop.xlane.xlu0 %618
        %620 = vadd.xlane.f32.xlu0 %v509
        %v621 = vpop.xlane.xlu0 %620
        %622 = vadd.xlane.f32.xlu0 %v510
        %v623 = vpop.xlane.xlu0 %622
        %624 = vadd.xlane.f32.xlu0 %v511
        %v625 = vpop.xlane.xlu0 %624
        %626 = vadd.xlane.f32.xlu0 %v512
        %v627 = vpop.xlane.xlu0 %626
        %628 = vadd.xlane.f32.xlu0 %v513
        %v629 = vpop.xlane.xlu0 %628
        %630 = vadd.xlane.f32.xlu0 %v514
        %v631 = vpop.xlane.xlu0 %630
        %632 = vadd.xlane.f32.xlu0 %v515
        %v633 = vpop.xlane.xlu0 %632
        %634 = vadd.xlane.f32.xlu0 %v516
        %v635 = vpop.xlane.xlu0 %634
        %636 = vadd.xlane.f32.xlu0 %v517
        %v637 = vpop.xlane.xlu0 %636
        %638 = vadd.xlane.f32.xlu0 %v518
        %v639 = vpop.xlane.xlu0 %638
        %640 = vadd.xlane.f32.xlu0 %v519
        %v641 = vpop.xlane.xlu0 %640
        %642 = vadd.xlane.f32.xlu0 %v520
        %v643 = vpop.xlane.xlu0 %642
        %644 = vadd.xlane.f32.xlu0 %v521
        %v645 = vpop.xlane.xlu0 %644
        %646 = vadd.xlane.f32.xlu0 %v522
        %v647 = vpop.xlane.xlu0 %646
        %648 = vadd.xlane.f32.xlu0 %v523
        %v649 = vpop.xlane.xlu0 %648
        %650 = vadd.xlane.f32.xlu0 %v524
        %v651 = vpop.xlane.xlu0 %650
        %652 = vadd.xlane.f32.xlu0 %v525
        %v653 = vpop.xlane.xlu0 %652
        %v654 = vmul.f32 %v335, 0.0078125
        %v655 = vmul.f32 %v337, 0.0078125
        %v656 = vmul.f32 %v339, 0.0078125
        %v657 = vmul.f32 %v341, 0.0078125
        %v658 = vmul.f32 %v343, 0.0078125
        %v659 = vmul.f32 %v345, 0.0078125
        %v660 = vmul.f32 %v347, 0.0078125
        %v661 = vmul.f32 %v349, 0.0078125
        %v662 = vmul.f32 %v351, 0.0078125
        %v663 = vmul.f32 %v353, 0.0078125
        %v664 = vmul.f32 %v355, 0.0078125
        %v665 = vmul.f32 %v357, 0.0078125
        %v666 = vmul.f32 %v359, 0.0078125
        %v667 = vmul.f32 %v361, 0.0078125
        %v668 = vmul.f32 %v363, 0.0078125
        %v669 = vmul.f32 %v365, 0.0078125
        %v670 = vmul.f32 %v367, 0.0078125
        %v671 = vmul.f32 %v369, 0.0078125
        %v672 = vmul.f32 %v371, 0.0078125
        %v673 = vmul.f32 %v373, 0.0078125
        %v674 = vmul.f32 %v375, 0.0078125
        %v675 = vmul.f32 %v377, 0.0078125
        %v676 = vmul.f32 %v379, 0.0078125
        %v677 = vmul.f32 %v381, 0.0078125
        %v678 = vmul.f32 %v383, 0.0078125
        %v679 = vmul.f32 %v385, 0.0078125
        %v680 = vmul.f32 %v387, 0.0078125
        %v681 = vmul.f32 %v389, 0.0078125
        %v682 = vmul.f32 %v391, 0.0078125
        %v683 = vmul.f32 %v393, 0.0078125
        %v684 = vmul.f32 %v395, 0.0078125
        %v685 = vmul.f32 %v397, 0.0078125
        %v686 = vmul.f32 %v399, 0.0078125
        %v687 = vmul.f32 %v401, 0.0078125
        %v688 = vmul.f32 %v403, 0.0078125
        %v689 = vmul.f32 %v405, 0.0078125
        %v690 = vmul.f32 %v407, 0.0078125
        %v691 = vmul.f32 %v409, 0.0078125
        %v692 = vmul.f32 %v411, 0.0078125
        %v693 = vmul.f32 %v413, 0.0078125
        %v694 = vmul.f32 %v415, 0.0078125
        %v695 = vmul.f32 %v417, 0.0078125
        %v696 = vmul.f32 %v419, 0.0078125
        %v697 = vmul.f32 %v421, 0.0078125
        %v698 = vmul.f32 %v423, 0.0078125
        %v699 = vmul.f32 %v425, 0.0078125
        %v700 = vmul.f32 %v427, 0.0078125
        %v701 = vmul.f32 %v429, 0.0078125
        %v702 = vmul.f32 %v431, 0.0078125
        %v703 = vmul.f32 %v433, 0.0078125
        %v704 = vmul.f32 %v435, 0.0078125
        %v705 = vmul.f32 %v437, 0.0078125
        %v706 = vmul.f32 %v439, 0.0078125
        %v707 = vmul.f32 %v441, 0.0078125
        %v708 = vmul.f32 %v443, 0.0078125
        %v709 = vmul.f32 %v445, 0.0078125
        %v710 = vmul.f32 %v447, 0.0078125
        %v711 = vmul.f32 %v449, 0.0078125
        %v712 = vmul.f32 %v451, 0.0078125
        %v713 = vmul.f32 %v453, 0.0078125
        %v714 = vmul.f32 %v455, 0.0078125
        %v715 = vmul.f32 %v457, 0.0078125
        %v716 = vmul.f32 %v459, 0.0078125
        %v717 = vmul.f32 %v461, 0.0078125
        %v718 = vmul.f32 %v527, 0.0078125
        %v719 = vmul.f32 %v529, 0.0078125
        %v720 = vmul.f32 %v531, 0.0078125
        %v721 = vmul.f32 %v533, 0.0078125
        %v722 = vmul.f32 %v535, 0.0078125
        %v723 = vmul.f32 %v537, 0.0078125
        %v724 = vmul.f32 %v539, 0.0078125
        %v725 = vmul.f32 %v541, 0.0078125
        %v726 = vmul.f32 %v543, 0.0078125
        %v727 = vmul.f32 %v545, 0.0078125
        %v728 = vmul.f32 %v547, 0.0078125
        %v729 = vmul.f32 %v549, 0.0078125
        %v730 = vmul.f32 %v551, 0.0078125
        %v731 = vmul.f32 %v553, 0.0078125
        %v732 = vmul.f32 %v555, 0.0078125
        %v733 = vmul.f32 %v557, 0.0078125
        %v734 = vmul.f32 %v559, 0.0078125
        %v735 = vmul.f32 %v561, 0.0078125
        %v736 = vmul.f32 %v563, 0.0078125
        %v737 = vmul.f32 %v565, 0.0078125
        %v738 = vmul.f32 %v567, 0.0078125
        %v739 = vmul.f32 %v569, 0.0078125
        %v740 = vmul.f32 %v571, 0.0078125
        %v741 = vmul.f32 %v573, 0.0078125
        %v742 = vmul.f32 %v575, 0.0078125
        %v743 = vmul.f32 %v577, 0.0078125
        %v744 = vmul.f32 %v579, 0.0078125
        %v745 = vmul.f32 %v581, 0.0078125
        %v746 = vmul.f32 %v583, 0.0078125
        %v747 = vmul.f32 %v585, 0.0078125
        %v748 = vmul.f32 %v587, 0.0078125
        %v749 = vmul.f32 %v589, 0.0078125
        %v750 = vmul.f32 %v591, 0.0078125
        %v751 = vmul.f32 %v593, 0.0078125
        %v752 = vmul.f32 %v595, 0.0078125
        %v753 = vmul.f32 %v597, 0.0078125
        %v754 = vmul.f32 %v599, 0.0078125
        %v755 = vmul.f32 %v601, 0.0078125
        %v756 = vmul.f32 %v603, 0.0078125
        %v757 = vmul.f32 %v605, 0.0078125
        %v758 = vmul.f32 %v607, 0.0078125
        %v759 = vmul.f32 %v609, 0.0078125
        %v760 = vmul.f32 %v611, 0.0078125
        %v761 = vmul.f32 %v613, 0.0078125
        %v762 = vmul.f32 %v615, 0.0078125
        %v763 = vmul.f32 %v617, 0.0078125
        %v764 = vmul.f32 %v619, 0.0078125
        %v765 = vmul.f32 %v621, 0.0078125
        %v766 = vmul.f32 %v623, 0.0078125
        %v767 = vmul.f32 %v625, 0.0078125
        %v768 = vmul.f32 %v627, 0.0078125
        %v769 = vmul.f32 %v629, 0.0078125
        %v770 = vmul.f32 %v631, 0.0078125
        %v771 = vmul.f32 %v633, 0.0078125
        %v772 = vmul.f32 %v635, 0.0078125
        %v773 = vmul.f32 %v637, 0.0078125
        %v774 = vmul.f32 %v639, 0.0078125
        %v775 = vmul.f32 %v641, 0.0078125
        %v776 = vmul.f32 %v643, 0.0078125
        %v777 = vmul.f32 %v645, 0.0078125
        %v778 = vmul.f32 %v647, 0.0078125
        %v779 = vmul.f32 %v649, 0.0078125
        %v780 = vmul.f32 %v651, 0.0078125
        %v781 = vmul.f32 %v653, 0.0078125
        %v782 = vmul.f32 %v654, %v654
        %v783 = vmul.f32 %v655, %v655
        %v784 = vmul.f32 %v656, %v656
        %v785 = vmul.f32 %v657, %v657
        %v786 = vmul.f32 %v658, %v658
        %v787 = vmul.f32 %v659, %v659
        %v788 = vmul.f32 %v660, %v660
        %v789 = vmul.f32 %v661, %v661
        %v790 = vmul.f32 %v662, %v662
        %v791 = vmul.f32 %v663, %v663
        %v792 = vmul.f32 %v664, %v664
        %v793 = vmul.f32 %v665, %v665
        %v794 = vmul.f32 %v666, %v666
        %v795 = vmul.f32 %v667, %v667
        %v796 = vmul.f32 %v668, %v668
        %v797 = vmul.f32 %v669, %v669
        %v798 = vmul.f32 %v670, %v670
        %v799 = vmul.f32 %v671, %v671
        %v800 = vmul.f32 %v672, %v672
        %v801 = vmul.f32 %v673, %v673
        %v802 = vmul.f32 %v674, %v674
        %v803 = vmul.f32 %v675, %v675
        %v804 = vmul.f32 %v676, %v676
        %v805 = vmul.f32 %v677, %v677
        %v806 = vmul.f32 %v678, %v678
        %v807 = vmul.f32 %v679, %v679
        %v808 = vmul.f32 %v680, %v680
        %v809 = vmul.f32 %v681, %v681
        %v810 = vmul.f32 %v682, %v682
        %v811 = vmul.f32 %v683, %v683
        %v812 = vmul.f32 %v684, %v684
        %v813 = vmul.f32 %v685, %v685
        %v814 = vmul.f32 %v686, %v686
        %v815 = vmul.f32 %v687, %v687
        %v816 = vmul.f32 %v688, %v688
        %v817 = vmul.f32 %v689, %v689
        %v818 = vmul.f32 %v690, %v690
        %v819 = vmul.f32 %v691, %v691
        %v820 = vmul.f32 %v692, %v692
        %v821 = vmul.f32 %v693, %v693
        %v822 = vmul.f32 %v694, %v694
        %v823 = vmul.f32 %v695, %v695
        %v824 = vmul.f32 %v696, %v696
        %v825 = vmul.f32 %v697, %v697
        %v826 = vmul.f32 %v698, %v698
        %v827 = vmul.f32 %v699, %v699
        %v828 = vmul.f32 %v700, %v700
        %v829 = vmul.f32 %v701, %v701
        %v830 = vmul.f32 %v702, %v702
        %v831 = vmul.f32 %v703, %v703
        %v832 = vmul.f32 %v704, %v704
        %v833 = vmul.f32 %v705, %v705
        %v834 = vmul.f32 %v706, %v706
        %v835 = vmul.f32 %v707, %v707
        %v836 = vmul.f32 %v708, %v708
        %v837 = vmul.f32 %v709, %v709
        %v838 = vmul.f32 %v710, %v710
        %v839 = vmul.f32 %v711, %v711
        %v840 = vmul.f32 %v712, %v712
        %v841 = vmul.f32 %v713, %v713
        %v842 = vmul.f32 %v714, %v714
        %v843 = vmul.f32 %v715, %v715
        %v844 = vmul.f32 %v716, %v716
        %v845 = vmul.f32 %v717, %v717
        %v846 = vsub.f32 %v718, %v782
        %v847 = vsub.f32 %v719, %v783
        %v848 = vsub.f32 %v720, %v784
        %v849 = vsub.f32 %v721, %v785
        %v850 = vsub.f32 %v722, %v786
        %v851 = vsub.f32 %v723, %v787
        %v852 = vsub.f32 %v724, %v788
        %v853 = vsub.f32 %v725, %v789
        %v854 = vsub.f32 %v726, %v790
        %v855 = vsub.f32 %v727, %v791
        %v856 = vsub.f32 %v728, %v792
        %v857 = vsub.f32 %v729, %v793
        %v858 = vsub.f32 %v730, %v794
        %v859 = vsub.f32 %v731, %v795
        %v860 = vsub.f32 %v732, %v796
        %v861 = vsub.f32 %v733, %v797
        %v862 = vsub.f32 %v734, %v798
        %v863 = vsub.f32 %v735, %v799
        %v864 = vsub.f32 %v736, %v800
        %v865 = vsub.f32 %v737, %v801
        %v866 = vsub.f32 %v738, %v802
        %v867 = vsub.f32 %v739, %v803
        %v868 = vsub.f32 %v740, %v804
        %v869 = vsub.f32 %v741, %v805
        %v870 = vsub.f32 %v742, %v806
        %v871 = vsub.f32 %v743, %v807
        %v872 = vsub.f32 %v744, %v808
        %v873 = vsub.f32 %v745, %v809
        %v874 = vsub.f32 %v746, %v810
        %v875 = vsub.f32 %v747, %v811
        %v876 = vsub.f32 %v748, %v812
        %v877 = vsub.f32 %v749, %v813
        %v878 = vsub.f32 %v750, %v814
        %v879 = vsub.f32 %v751, %v815
        %v880 = vsub.f32 %v752, %v816
        %v881 = vsub.f32 %v753, %v817
        %v882 = vsub.f32 %v754, %v818
        %v883 = vsub.f32 %v755, %v819
        %v884 = vsub.f32 %v756, %v820
        %v885 = vsub.f32 %v757, %v821
        %v886 = vsub.f32 %v758, %v822
        %v887 = vsub.f32 %v759, %v823
        %v888 = vsub.f32 %v760, %v824
        %v889 = vsub.f32 %v761, %v825
        %v890 = vsub.f32 %v762, %v826
        %v891 = vsub.f32 %v763, %v827
        %v892 = vsub.f32 %v764, %v828
        %v893 = vsub.f32 %v765, %v829
        %v894 = vsub.f32 %v766, %v830
        %v895 = vsub.f32 %v767, %v831
        %v896 = vsub.f32 %v768, %v832
        %v897 = vsub.f32 %v769, %v833
        %v898 = vsub.f32 %v770, %v834
        %v899 = vsub.f32 %v771, %v835
        %v900 = vsub.f32 %v772, %v836
        %v901 = vsub.f32 %v773, %v837
        %v902 = vsub.f32 %v774, %v838
        %v903 = vsub.f32 %v775, %v839
        %v904 = vsub.f32 %v776, %v840
        %v905 = vsub.f32 %v777, %v841
        %v906 = vsub.f32 %v778, %v842
        %v907 = vsub.f32 %v779, %v843
        %v908 = vsub.f32 %v780, %v844
        %v909 = vsub.f32 %v781, %v845
        %v910 = vmax.f32 %v846, 0.0
        %v911 = vmax.f32 %v847, 0.0
        %v912 = vmax.f32 %v848, 0.0
        %v913 = vmax.f32 %v849, 0.0
        %v914 = vmax.f32 %v850, 0.0
        %v915 = vmax.f32 %v851, 0.0
        %v916 = vmax.f32 %v852, 0.0
        %v917 = vmax.f32 %v853, 0.0
        %v918 = vmax.f32 %v854, 0.0
        %v919 = vmax.f32 %v855, 0.0
        %v920 = vmax.f32 %v856, 0.0
        %v921 = vmax.f32 %v857, 0.0
        %v922 = vmax.f32 %v858, 0.0
        %v923 = vmax.f32 %v859, 0.0
        %v924 = vmax.f32 %v860, 0.0
        %v925 = vmax.f32 %v861, 0.0
        %v926 = vmax.f32 %v862, 0.0
        %v927 = vmax.f32 %v863, 0.0
        %v928 = vmax.f32 %v864, 0.0
        %v929 = vmax.f32 %v865, 0.0
        %v930 = vmax.f32 %v866, 0.0
        %v931 = vmax.f32 %v867, 0.0
        %v932 = vmax.f32 %v868, 0.0
        %v933 = vmax.f32 %v869, 0.0
        %v934 = vmax.f32 %v870, 0.0
        %v935 = vmax.f32 %v871, 0.0
        %v936 = vmax.f32 %v872, 0.0
        %v937 = vmax.f32 %v873, 0.0
        %v938 = vmax.f32 %v874, 0.0
        %v939 = vmax.f32 %v875, 0.0
        %v940 = vmax.f32 %v876, 0.0
        %v941 = vmax.f32 %v877, 0.0
        %v942 = vmax.f32 %v878, 0.0
        %v943 = vmax.f32 %v879, 0.0
        %v944 = vmax.f32 %v880, 0.0
        %v945 = vmax.f32 %v881, 0.0
        %v946 = vmax.f32 %v882, 0.0
        %v947 = vmax.f32 %v883, 0.0
        %v948 = vmax.f32 %v884, 0.0
        %v949 = vmax.f32 %v885, 0.0
        %v950 = vmax.f32 %v886, 0.0
        %v951 = vmax.f32 %v887, 0.0
        %v952 = vmax.f32 %v888, 0.0
        %v953 = vmax.f32 %v889, 0.0
        %v954 = vmax.f32 %v890, 0.0
        %v955 = vmax.f32 %v891, 0.0
        %v956 = vmax.f32 %v892, 0.0
        %v957 = vmax.f32 %v893, 0.0
        %v958 = vmax.f32 %v894, 0.0
        %v959 = vmax.f32 %v895, 0.0
        %v960 = vmax.f32 %v896, 0.0
        %v961 = vmax.f32 %v897, 0.0
        %v962 = vmax.f32 %v898, 0.0
        %v963 = vmax.f32 %v899, 0.0
        %v964 = vmax.f32 %v900, 0.0
        %v965 = vmax.f32 %v901, 0.0
        %v966 = vmax.f32 %v902, 0.0
        %v967 = vmax.f32 %v903, 0.0
        %v968 = vmax.f32 %v904, 0.0
        %v969 = vmax.f32 %v905, 0.0
        %v970 = vmax.f32 %v906, 0.0
        %v971 = vmax.f32 %v907, 0.0
        %v972 = vmax.f32 %v908, 0.0
        %v973 = vmax.f32 %v909, 0.0
        %v974 = vsub.f32 %v270, %v654
        %v975 = vsub.f32 %v271, %v655
        %v976 = vsub.f32 %v272, %v656
        %v977 = vsub.f32 %v273, %v657
        %v978 = vsub.f32 %v274, %v658
        %v979 = vsub.f32 %v275, %v659
        %v980 = vsub.f32 %v276, %v660
        %v981 = vsub.f32 %v277, %v661
        %v982 = vsub.f32 %v278, %v662
        %v983 = vsub.f32 %v279, %v663
        %v984 = vsub.f32 %v280, %v664
        %v985 = vsub.f32 %v281, %v665
        %v986 = vsub.f32 %v282, %v666
        %v987 = vsub.f32 %v283, %v667
        %v988 = vsub.f32 %v284, %v668
        %v989 = vsub.f32 %v285, %v669
        %v990 = vsub.f32 %v286, %v670
        %v991 = vsub.f32 %v287, %v671
        %v992 = vsub.f32 %v288, %v672
        %v993 = vsub.f32 %v289, %v673
        %v994 = vsub.f32 %v290, %v674
        %v995 = vsub.f32 %v291, %v675
        %v996 = vsub.f32 %v292, %v676
        %v997 = vsub.f32 %v293, %v677
        %v998 = vsub.f32 %v294, %v678
        %v999 = vsub.f32 %v295, %v679
        %v1000 = vsub.f32 %v296, %v680
        %v1001 = vsub.f32 %v297, %v681
        %v1002 = vsub.f32 %v298, %v682
        %v1003 = vsub.f32 %v299, %v683
        %v1004 = vsub.f32 %v300, %v684
        %v1005 = vsub.f32 %v301, %v685
        %v1006 = vsub.f32 %v302, %v686
        %v1007 = vsub.f32 %v303, %v687
        %v1008 = vsub.f32 %v304, %v688
        %v1009 = vsub.f32 %v305, %v689
        %v1010 = vsub.f32 %v306, %v690
        %v1011 = vsub.f32 %v307, %v691
        %v1012 = vsub.f32 %v308, %v692
        %v1013 = vsub.f32 %v309, %v693
        %v1014 = vsub.f32 %v310, %v694
        %v1015 = vsub.f32 %v311, %v695
        %v1016 = vsub.f32 %v312, %v696
        %v1017 = vsub.f32 %v313, %v697
        %v1018 = vsub.f32 %v314, %v698
        %v1019 = vsub.f32 %v315, %v699
        %v1020 = vsub.f32 %v316, %v700
        %v1021 = vsub.f32 %v317, %v701
        %v1022 = vsub.f32 %v318, %v702
        %v1023 = vsub.f32 %v319, %v703
        %v1024 = vsub.f32 %v320, %v704
        %v1025 = vsub.f32 %v321, %v705
        %v1026 = vsub.f32 %v322, %v706
        %v1027 = vsub.f32 %v323, %v707
        %v1028 = vsub.f32 %v324, %v708
        %v1029 = vsub.f32 %v325, %v709
        %v1030 = vsub.f32 %v326, %v710
        %v1031 = vsub.f32 %v327, %v711
        %v1032 = vsub.f32 %v328, %v712
        %v1033 = vsub.f32 %v329, %v713
        %v1034 = vsub.f32 %v330, %v714
        %v1035 = vsub.f32 %v331, %v715
        %v1036 = vsub.f32 %v332, %v716
        %v1037 = vsub.f32 %v333, %v717
        %v1038 = vadd.f32 %v910, 1e-05
        %v1039 = vadd.f32 %v911, 1e-05
        %v1040 = vadd.f32 %v912, 1e-05
        %v1041 = vadd.f32 %v913, 1e-05
        %v1042 = vadd.f32 %v914, 1e-05
        %v1043 = vadd.f32 %v915, 1e-05
        %v1044 = vadd.f32 %v916, 1e-05
        %v1045 = vadd.f32 %v917, 1e-05
        %v1046 = vadd.f32 %v918, 1e-05
        %v1047 = vadd.f32 %v919, 1e-05
        %v1048 = vadd.f32 %v920, 1e-05
        %v1049 = vadd.f32 %v921, 1e-05
        %v1050 = vadd.f32 %v922, 1e-05
        %v1051 = vadd.f32 %v923, 1e-05
        %v1052 = vadd.f32 %v924, 1e-05
        %v1053 = vadd.f32 %v925, 1e-05
        %v1054 = vadd.f32 %v926, 1e-05
        %v1055 = vadd.f32 %v927, 1e-05
        %v1056 = vadd.f32 %v928, 1e-05
        %v1057 = vadd.f32 %v929, 1e-05
        %v1058 = vadd.f32 %v930, 1e-05
        %v1059 = vadd.f32 %v931, 1e-05
        %v1060 = vadd.f32 %v932, 1e-05
        %v1061 = vadd.f32 %v933, 1e-05
        %v1062 = vadd.f32 %v934, 1e-05
        %v1063 = vadd.f32 %v935, 1e-05
        %v1064 = vadd.f32 %v936, 1e-05
        %v1065 = vadd.f32 %v937, 1e-05
        %v1066 = vadd.f32 %v938, 1e-05
        %v1067 = vadd.f32 %v939, 1e-05
        %v1068 = vadd.f32 %v940, 1e-05
        %v1069 = vadd.f32 %v941, 1e-05
        %v1070 = vadd.f32 %v942, 1e-05
        %v1071 = vadd.f32 %v943, 1e-05
        %v1072 = vadd.f32 %v944, 1e-05
        %v1073 = vadd.f32 %v945, 1e-05
        %v1074 = vadd.f32 %v946, 1e-05
        %v1075 = vadd.f32 %v947, 1e-05
        %v1076 = vadd.f32 %v948, 1e-05
        %v1077 = vadd.f32 %v949, 1e-05
        %v1078 = vadd.f32 %v950, 1e-05
        %v1079 = vadd.f32 %v951, 1e-05
        %v1080 = vadd.f32 %v952, 1e-05
        %v1081 = vadd.f32 %v953, 1e-05
        %v1082 = vadd.f32 %v954, 1e-05
        %v1083 = vadd.f32 %v955, 1e-05
        %v1084 = vadd.f32 %v956, 1e-05
        %v1085 = vadd.f32 %v957, 1e-05
        %v1086 = vadd.f32 %v958, 1e-05
        %v1087 = vadd.f32 %v959, 1e-05
        %v1088 = vadd.f32 %v960, 1e-05
        %v1089 = vadd.f32 %v961, 1e-05
        %v1090 = vadd.f32 %v962, 1e-05
        %v1091 = vadd.f32 %v963, 1e-05
        %v1092 = vadd.f32 %v964, 1e-05
        %v1093 = vadd.f32 %v965, 1e-05
        %v1094 = vadd.f32 %v966, 1e-05
        %v1095 = vadd.f32 %v967, 1e-05
        %v1096 = vadd.f32 %v968, 1e-05
        %v1097 = vadd.f32 %v969, 1e-05
        %v1098 = vadd.f32 %v970, 1e-05
        %v1099 = vadd.f32 %v971, 1e-05
        %v1100 = vadd.f32 %v972, 1e-05
        %v1101 = vadd.f32 %v973, 1e-05
        %v1102 = vrsqrt.pop %v1038
        %v1103 = vrsqrt.pop %v1039
        %v1104 = vrsqrt.pop %v1040
        %v1105 = vrsqrt.pop %v1041
        %v1106 = vrsqrt.pop %v1042
        %v1107 = vrsqrt.pop %v1043
        %v1108 = vrsqrt.pop %v1044
        %v1109 = vrsqrt.pop %v1045
        %v1110 = vrsqrt.pop %v1046
        %v1111 = vrsqrt.pop %v1047
        %v1112 = vrsqrt.pop %v1048
        %v1113 = vrsqrt.pop %v1049
        %v1114 = vrsqrt.pop %v1050
        %v1115 = vrsqrt.pop %v1051
        %v1116 = vrsqrt.pop %v1052
        %v1117 = vrsqrt.pop %v1053
        %v1118 = vrsqrt.pop %v1054
        %v1119 = vrsqrt.pop %v1055
        %v1120 = vrsqrt.pop %v1056
        %v1121 = vrsqrt.pop %v1057
        %v1122 = vrsqrt.pop %v1058
        %v1123 = vrsqrt.pop %v1059
        %v1124 = vrsqrt.pop %v1060
        %v1125 = vrsqrt.pop %v1061
        %v1126 = vrsqrt.pop %v1062
        %v1127 = vrsqrt.pop %v1063
        %v1128 = vrsqrt.pop %v1064
        %v1129 = vrsqrt.pop %v1065
        %v1130 = vrsqrt.pop %v1066
        %v1131 = vrsqrt.pop %v1067
        %v1132 = vrsqrt.pop %v1068
        %v1133 = vrsqrt.pop %v1069
        %v1134 = vrsqrt.pop %v1070
        %v1135 = vrsqrt.pop %v1071
        %v1136 = vrsqrt.pop %v1072
        %v1137 = vrsqrt.pop %v1073
        %v1138 = vrsqrt.pop %v1074
        %v1139 = vrsqrt.pop %v1075
        %v1140 = vrsqrt.pop %v1076
        %v1141 = vrsqrt.pop %v1077
        %v1142 = vrsqrt.pop %v1078
        %v1143 = vrsqrt.pop %v1079
        %v1144 = vrsqrt.pop %v1080
        %v1145 = vrsqrt.pop %v1081
        %v1146 = vrsqrt.pop %v1082
        %v1147 = vrsqrt.pop %v1083
        %v1148 = vrsqrt.pop %v1084
        %v1149 = vrsqrt.pop %v1085
        %v1150 = vrsqrt.pop %v1086
        %v1151 = vrsqrt.pop %v1087
        %v1152 = vrsqrt.pop %v1088
        %v1153 = vrsqrt.pop %v1089
        %v1154 = vrsqrt.pop %v1090
        %v1155 = vrsqrt.pop %v1091
        %v1156 = vrsqrt.pop %v1092
        %v1157 = vrsqrt.pop %v1093
        %v1158 = vrsqrt.pop %v1094
        %v1159 = vrsqrt.pop %v1095
        %v1160 = vrsqrt.pop %v1096
        %v1161 = vrsqrt.pop %v1097
        %v1162 = vrsqrt.pop %v1098
        %v1163 = vrsqrt.pop %v1099
        %v1164 = vrsqrt.pop %v1100
        %v1165 = vrsqrt.pop %v1101
        %v1166 = vmul.f32 %v974, %v1102
        %v1167 = vmul.f32 %v975, %v1103
        %v1168 = vmul.f32 %v976, %v1104
        %v1169 = vmul.f32 %v977, %v1105
        %v1170 = vmul.f32 %v978, %v1106
        %v1171 = vmul.f32 %v979, %v1107
        %v1172 = vmul.f32 %v980, %v1108
        %v1173 = vmul.f32 %v981, %v1109
        %v1174 = vmul.f32 %v982, %v1110
        %v1175 = vmul.f32 %v983, %v1111
        %v1176 = vmul.f32 %v984, %v1112
        %v1177 = vmul.f32 %v985, %v1113
        %v1178 = vmul.f32 %v986, %v1114
        %v1179 = vmul.f32 %v987, %v1115
        %v1180 = vmul.f32 %v988, %v1116
        %v1181 = vmul.f32 %v989, %v1117
        %v1182 = vmul.f32 %v990, %v1118
        %v1183 = vmul.f32 %v991, %v1119
        %v1184 = vmul.f32 %v992, %v1120
        %v1185 = vmul.f32 %v993, %v1121
        %v1186 = vmul.f32 %v994, %v1122
        %v1187 = vmul.f32 %v995, %v1123
        %v1188 = vmul.f32 %v996, %v1124
        %v1189 = vmul.f32 %v997, %v1125
        %v1190 = vmul.f32 %v998, %v1126
        %v1191 = vmul.f32 %v999, %v1127
        %v1192 = vmul.f32 %v1000, %v1128
        %v1193 = vmul.f32 %v1001, %v1129
        %v1194 = vmul.f32 %v1002, %v1130
        %v1195 = vmul.f32 %v1003, %v1131
        %v1196 = vmul.f32 %v1004, %v1132
        %v1197 = vmul.f32 %v1005, %v1133
        %v1198 = vmul.f32 %v1006, %v1134
        %v1199 = vmul.f32 %v1007, %v1135
        %v1200 = vmul.f32 %v1008, %v1136
        %v1201 = vmul.f32 %v1009, %v1137
        %v1202 = vmul.f32 %v1010, %v1138
        %v1203 = vmul.f32 %v1011, %v1139
        %v1204 = vmul.f32 %v1012, %v1140
        %v1205 = vmul.f32 %v1013, %v1141
        %v1206 = vmul.f32 %v1014, %v1142
        %v1207 = vmul.f32 %v1015, %v1143
        %v1208 = vmul.f32 %v1016, %v1144
        %v1209 = vmul.f32 %v1017, %v1145
        %v1210 = vmul.f32 %v1018, %v1146
        %v1211 = vmul.f32 %v1019, %v1147
        %v1212 = vmul.f32 %v1020, %v1148
        %v1213 = vmul.f32 %v1021, %v1149
        %v1214 = vmul.f32 %v1022, %v1150
        %v1215 = vmul.f32 %v1023, %v1151
        %v1216 = vmul.f32 %v1024, %v1152
        %v1217 = vmul.f32 %v1025, %v1153
        %v1218 = vmul.f32 %v1026, %v1154
        %v1219 = vmul.f32 %v1027, %v1155
        %v1220 = vmul.f32 %v1028, %v1156
        %v1221 = vmul.f32 %v1029, %v1157
        %v1222 = vmul.f32 %v1030, %v1158
        %v1223 = vmul.f32 %v1031, %v1159
        %v1224 = vmul.f32 %v1032, %v1160
        %v1225 = vmul.f32 %v1033, %v1161
        %v1226 = vmul.f32 %v1034, %v1162
        %v1227 = vmul.f32 %v1035, %v1163
        %v1228 = vmul.f32 %v1036, %v1164
        %v1229 = vmul.f32 %v1037, %v1165
        %v1230 = vadd.f32 %v1166, %v1167
        %v1231 = vadd.f32 %v1230, %v1168
        %v1232 = vadd.f32 %v1231, %v1169
        %v1233 = vadd.f32 %v1232, %v1170
        %v1234 = vadd.f32 %v1233, %v1171
        %v1235 = vadd.f32 %v1234, %v1172
        %v1236 = vadd.f32 %v1235, %v1173
        %v1237 = vrot.slane %v1236, 4
        %v1238 = vadd.f32 %v1236, %v1237
        %v1239 = vrot.slane %v1238, 2
        %v1240 = vadd.f32 %v1238, %v1239
        %v1241 = vrot.slane %v1240, 1
        %v1242 = vadd.f32 %v1240, %v1241
        %v1243 = vadd.f32 %v1174, %v1175
        %v1244 = vadd.f32 %v1243, %v1176
        %v1245 = vadd.f32 %v1244, %v1177
        %v1246 = vadd.f32 %v1245, %v1178
        %v1247 = vadd.f32 %v1246, %v1179
        %v1248 = vadd.f32 %v1247, %v1180
        %v1249 = vadd.f32 %v1248, %v1181
        %v1250 = vrot.slane %v1249, 4
        %v1251 = vadd.f32 %v1249, %v1250
        %v1252 = vrot.slane %v1251, 2
        %v1253 = vadd.f32 %v1251, %v1252
        %v1254 = vrot.slane %v1253, 1
        %v1255 = vadd.f32 %v1253, %v1254
        %v1256 = vadd.f32 %v1182, %v1183
        %v1257 = vadd.f32 %v1256, %v1184
        %v1258 = vadd.f32 %v1257, %v1185
        %v1259 = vadd.f32 %v1258, %v1186
        %v1260 = vadd.f32 %v1259, %v1187
        %v1261 = vadd.f32 %v1260, %v1188
        %v1262 = vadd.f32 %v1261, %v1189
        %v1263 = vrot.slane %v1262, 4
        %v1264 = vadd.f32 %v1262, %v1263
        %v1265 = vrot.slane %v1264, 2
        %v1266 = vadd.f32 %v1264, %v1265
        %v1267 = vrot.slane %v1266, 1
        %v1268 = vadd.f32 %v1266, %v1267
        %v1269 = vadd.f32 %v1190, %v1191
        %v1270 = vadd.f32 %v1269, %v1192
        %v1271 = vadd.f32 %v1270, %v1193
        %v1272 = vadd.f32 %v1271, %v1194
        %v1273 = vadd.f32 %v1272, %v1195
        %v1274 = vadd.f32 %v1273, %v1196
        %v1275 = vadd.f32 %v1274, %v1197
        %v1276 = vrot.slane %v1275, 4
        %v1277 = vadd.f32 %v1275, %v1276
        %v1278 = vrot.slane %v1277, 2
        %v1279 = vadd.f32 %v1277, %v1278
        %v1280 = vrot.slane %v1279, 1
        %v1281 = vadd.f32 %v1279, %v1280
        %v1282 = vadd.f32 %v1198, %v1199
        %v1283 = vadd.f32 %v1282, %v1200
        %v1284 = vadd.f32 %v1283, %v1201
        %v1285 = vadd.f32 %v1284, %v1202
        %v1286 = vadd.f32 %v1285, %v1203
        %v1287 = vadd.f32 %v1286, %v1204
        %v1288 = vadd.f32 %v1287, %v1205
        %v1289 = vrot.slane %v1288, 4
        %v1290 = vadd.f32 %v1288, %v1289
        %v1291 = vrot.slane %v1290, 2
        %v1292 = vadd.f32 %v1290, %v1291
        %v1293 = vrot.slane %v1292, 1
        %v1294 = vadd.f32 %v1292, %v1293
        %v1295 = vadd.f32 %v1206, %v1207
        %v1296 = vadd.f32 %v1295, %v1208
        %v1297 = vadd.f32 %v1296, %v1209
        %v1298 = vadd.f32 %v1297, %v1210
        %v1299 = vadd.f32 %v1298, %v1211
        %v1300 = vadd.f32 %v1299, %v1212
        %v1301 = vadd.f32 %v1300, %v1213
        %v1302 = vrot.slane %v1301, 4
        %v1303 = vadd.f32 %v1301, %v1302
        %v1304 = vrot.slane %v1303, 2
        %v1305 = vadd.f32 %v1303, %v1304
        %v1306 = vrot.slane %v1305, 1
        %v1307 = vadd.f32 %v1305, %v1306
        %v1308 = vadd.f32 %v1214, %v1215
        %v1309 = vadd.f32 %v1308, %v1216
        %v1310 = vadd.f32 %v1309, %v1217
        %v1311 = vadd.f32 %v1310, %v1218
        %v1312 = vadd.f32 %v1311, %v1219
        %v1313 = vadd.f32 %v1312, %v1220
        %v1314 = vadd.f32 %v1313, %v1221
        %v1315 = vrot.slane %v1314, 4
        %v1316 = vadd.f32 %v1314, %v1315
        %v1317 = vrot.slane %v1316, 2
        %v1318 = vadd.f32 %v1316, %v1317
        %v1319 = vrot.slane %v1318, 1
        %v1320 = vadd.f32 %v1318, %v1319
        %v1321 = vadd.f32 %v1222, %v1223
        %v1322 = vadd.f32 %v1321, %v1224
        %v1323 = vadd.f32 %v1322, %v1225
        %v1324 = vadd.f32 %v1323, %v1226
        %v1325 = vadd.f32 %v1324, %v1227
        %v1326 = vadd.f32 %v1325, %v1228
        %v1327 = vadd.f32 %v1326, %v1229
        %v1328 = vrot.slane %v1327, 4
        %v1329 = vadd.f32 %v1327, %v1328
        %v1330 = vrot.slane %v1329, 2
        %v1331 = vadd.f32 %v1329, %v1330
        %v1332 = vrot.slane %v1331, 1
        %v1333 = vadd.f32 %v1331, %v1332
        %v1334 = vrcp.pop 64.0
        %v1335 = vmul.f32 %v1242, %v1334
        %v1336 = vmul.f32 %v1255, %v1334
        %v1337 = vmul.f32 %v1268, %v1334
        %v1338 = vmul.f32 %v1281, %v1334
        %v1339 = vmul.f32 %v1294, %v1334
        %v1340 = vmul.f32 %v1307, %v1334
        %v1341 = vmul.f32 %v1320, %v1334
        %v1342 = vmul.f32 %v1333, %v1334
        %v1343 = vld [vmem:[#allocation4] sm:$0xff]
        %v1344 = vld [vmem:[#allocation4 + $0x8] sm:$0xff]
        %v1345 = vld [vmem:[#allocation4 + $0x10] sm:$0xff]
        %v1346 = vld [vmem:[#allocation4 + $0x18] sm:$0xff]
        %v1347 = vld [vmem:[#allocation4 + $0x20] sm:$0xff]
        %v1348 = vld [vmem:[#allocation4 + $0x28] sm:$0xff]
        %v1349 = vld [vmem:[#allocation4 + $0x30] sm:$0xff]
        %v1350 = vld [vmem:[#allocation4 + $0x38] sm:$0xff]
        %v1351 = vld [vmem:[#allocation4 + $0x40] sm:$0xff]
        %v1352 = vld [vmem:[#allocation4 + $0x48] sm:$0xff]
        %v1353 = vld [vmem:[#allocation4 + $0x50] sm:$0xff]
        %v1354 = vld [vmem:[#allocation4 + $0x58] sm:$0xff]
        %v1355 = vld [vmem:[#allocation4 + $0x60] sm:$0xff]
        %v1356 = vld [vmem:[#allocation4 + $0x68] sm:$0xff]
        %v1357 = vld [vmem:[#allocation4 + $0x70] sm:$0xff]
        %v1358 = vld [vmem:[#allocation4 + $0x78] sm:$0xff]
        %v1359 = vld [vmem:[%s2] sm:$0x1]
        %v1361 = vlaneseq
        %v1362 = vshrl.u32 %v1361, 7
        %v1363 = vsub.s32 0, %v1362
        %v1364 = vrot.slane %v1359, %v1363
        %vm1374 = vcmask 1041409
        %v1375 = vsel %vm1374, %v1336, %v1335
        %vm1376 = vcmask 1042434
        %v1377 = vsel %vm1376, %v1337, %v1375
        %vm1378 = vcmask 1043459
        %v1379 = vsel %vm1378, %v1338, %v1377
        %vm1380 = vcmask 1044484
        %v1381 = vsel %vm1380, %v1339, %v1379
        %vm1382 = vcmask 1045509
        %v1383 = vsel %vm1382, %v1340, %v1381
        %vm1384 = vcmask 1046534
        %v1385 = vsel %vm1384, %v1341, %v1383
        %vm1386 = vcmask 1047559
        %v1387 = vsel %vm1386, %v1342, %v1385
        %1389 = vmatprep.subr.mxu0 0.0
        %1390 = vmatpush1.msra.mxu0 %v1343
        %1391 = vmatprep.subr.mxu0 0.0
        %1392 = vmatpush1.msra.mxu0 %v1344
        %1393 = vmatprep.subr.mxu0 0.0
        %1394 = vmatpush1.msra.mxu0 %v1345
        %1395 = vmatprep.subr.mxu0 0.0
        %1396 = vmatpush1.msra.mxu0 %v1346
        %1397 = vmatprep.subr.mxu0 0.0
        %1398 = vmatpush1.msra.mxu0 %v1347
        %1399 = vmatprep.subr.mxu0 0.0
        %1400 = vmatpush1.msra.mxu0 %v1348
        %1401 = vmatprep.subr.mxu0 0.0
        %1402 = vmatpush1.msra.mxu0 %v1349
        %1403 = vmatprep.subr.mxu0 0.0
        %1404 = vmatpush1.msra.mxu0 %v1350
        %1405 = vmatprep.subr.mxu0 0.0
        %1406 = vmatpush1.msra.mxu0 %v1351
        %1407 = vmatprep.subr.mxu0 0.0
        %1408 = vmatpush1.msra.mxu0 %v1352
        %1409 = vmatprep.subr.mxu0 0.0
        %1410 = vmatpush1.msra.mxu0 %v1353
        %1411 = vmatprep.subr.mxu0 0.0
        %1412 = vmatpush1.msra.mxu0 %v1354
        %1413 = vmatprep.subr.mxu0 0.0
        %1414 = vmatpush1.msra.mxu0 %v1355
        %1415 = vmatprep.subr.mxu0 0.0
        %1416 = vmatpush1.msra.mxu0 %v1356
        %1417 = vmatprep.subr.mxu0 0.0
        %1418 = vmatpush1.msra.mxu0 %v1357
        %1419 = vmatprep.subr.mxu0 0.0
        %1420 = vmatpush1.msra.mxu0 %v1358
        %1421 = vmatprep.subr.mxu0 0.0
        %1422 = vmatpush1.msra.mxu0 0.0
        %1423 = vmatprep.subr.mxu0 0.0
        %1424 = vmatpush1.msra.mxu0 0.0
        %1425 = vmatprep.subr.mxu0 0.0
        %1426 = vmatpush1.msra.mxu0 0.0
        %1427 = vmatprep.subr.mxu0 0.0
        %1428 = vmatpush1.msra.mxu0 0.0
        %1429 = vmatprep.subr.mxu0 0.0
        %1430 = vmatpush1.msra.mxu0 0.0
        %1431 = vmatprep.subr.mxu0 0.0
        %1432 = vmatpush1.msra.mxu0 0.0
        %1433 = vmatprep.subr.mxu0 0.0
        %1434 = vmatpush1.msra.mxu0 0.0
        %1435 = vmatprep.subr.mxu0 0.0
        %1436 = vmatpush1.msra.mxu0 0.0
        %1437 = vmatprep.subr.mxu0 0.0
        %1438 = vmatpush1.msra.mxu0 0.0
        %1439 = vmatprep.subr.mxu0 0.0
        %1440 = vmatpush1.msra.mxu0 0.0
        %1441 = vmatprep.subr.mxu0 0.0
        %1442 = vmatpush1.msra.mxu0 0.0
        %1443 = vmatprep.subr.mxu0 0.0
        %1444 = vmatpush1.msra.mxu0 0.0
        %1445 = vmatprep.subr.mxu0 0.0
        %1446 = vmatpush1.msra.mxu0 0.0
        %1447 = vmatprep.subr.mxu0 0.0
        %1448 = vmatpush1.msra.mxu0 0.0
        %1449 = vmatprep.subr.mxu0 0.0
        %1450 = vmatpush1.msra.mxu0 0.0
        %1451 = vmatprep.subr.mxu0 0.0
        %1452 = vmatpush1.msra.mxu0 0.0
        %1453 = vmatprep.mubr.f32.mxu0 0.0
        %1454 = vmatmul.mubr.f32.gmra.mrb[0].mxu0 %v1387
        %v1455 = vpop.f32.mrb[0].mxu0
        %v1456 = vadd.f32 %v1364, %v1455
        %v1457 = vpop.f32.mrb[0].mxu0
        %1458 = vdwg.mxu0
        %v1459 = vxor.u32 %v1456, 2147483648
        %v1460 = vmul.f32 %v1459, 1.442695
        %v1461 = vpow.pop %v1460
        %v1462 = vadd.f32 %v1461, 1.0
        %v1463 = vrcp.pop %v1462
        %v1464 = vmul.f32 1.0, %v1463
        %1465 = vst [vmem:[%s205] sm:$0xff] %v1464
        %p1466 = scmp.lt.s32.totalorder %s18, 1
        %s1467 = scalar_select %p1466, %s18, 1
        %s1468 = smul.addr %s1467, 8
        %s1469 = scalar_lea.vmem %s3, %s1468
        // Predicated region
        $region41: #{multilabel_head.1} parent=31 // pred_check
          %p1470 = pneg %p104
        $region42: #{multilabel_head.1} parent=31 // pred_check_branch
          %1472 = sbr.rel (%p1470) target = $region44
        $region43: #{multilabel_head.1} parent=31 // pred_region
          _
        $region44: #{multilabel_head.1} parent=31 // pred_fallthru
          _
      $region32: #{multilabel_head.1} parent=5 // pred_fallthru
        _
      %p1473 = scmp.le.s32.totalorder 2, %s13
      // Predicated region
      $region45: #{multilabel_head.1} parent=5 // pred_check
        %p1474 = pneg %p1473
      $region46: #{multilabel_head.1} parent=5 // pred_check_branch
        %1476 = sbr.rel (%p1474) target = $region48
      $region47: #{multilabel_head.1} parent=5 // pred_region
        %s1477 = ssub.s32 %s13, 2
        // Predicated region
        $region49: #{multilabel_head.1} parent=47 // pred_check
          %p1478 = pneg %p110
        $region50: #{multilabel_head.1} parent=47 // pred_check_branch
          %1480 = sbr.rel (%p1478) target = $region52
        $region51: #{multilabel_head.1} parent=47 // pred_region
          %p1481 = scmp.lt.s32.totalorder %s19, 1
          %s1482 = scalar_select %p1481, %s19, 1
          %s1483 = smul.addr %s1482, 8
          %s1484 = scalar_lea.vmem %s3, %s1483
        $region52: #{multilabel_head.1} parent=47 // pred_fallthru
          _
      $region48: #{multilabel_head.1} parent=5 // pred_fallthru
        _
    $region6: #{multilabel_head.1} parent=1 // loop_footer
      %s17 = sadd.s32 1, %s13
    $region7: #{multilabel_head.1} parent=1 // loop_footer_branch
      %12 = sbr.rel target = $region3
    $region8: #{multilabel_head.1} parent=1 // loop_exit
      _
    %1485 = vsyncpa [#allocation3], 1
    %s1486 = scalar_lea.sflag [#allocation3], 1
    %1487 = vsyncpa %s1486, 1
    %1488 = vsyncpa [#allocation5], 1

</llo_original>
